<compile_context>
chip_gen: v5e
topology: v5e:2x2
jax: 0.10.0
libtpu: 0.0.40
codegen_flags: <defaults>
</compile_context>

<pallas_src>
import functools

import jax
import jax.numpy as jnp
from jax.experimental import pallas as pl
from jax.experimental.pallas import tpu as pltpu


# ---------------------------------------------------------------------------
# Shared gate math (everything downstream of the fused projection z = xW + b).
# ---------------------------------------------------------------------------
def _mlstm_gate_math(z, C_prev, n_prev, m_prev):
    """z:(B,6H) C:(B,H,H) n,m:(B,H)  ->  (h_t, C_t, n_t, m_t)."""
    H = n_prev.shape[-1]

    i_tilda = z[:, 0 * H:1 * H]
    f_tilda = z[:, 1 * H:2 * H]
    o_tilda = z[:, 2 * H:3 * H]
    q_t     = z[:, 3 * H:4 * H]
    k_t     = z[:, 4 * H:5 * H]          # 1/sqrt(H) already folded into W_k
    v_t     = z[:, 5 * H:6 * H]

    # Stable log(sigmoid(f)) = min(f,0) - log(1 + exp(-|f|)); reuse it for f_t
    # so only one sigmoid-equivalent hits the single-slot EUP.
    log_f = jnp.minimum(f_tilda, 0.0) - jnp.log(1.0 + jnp.exp(-jnp.abs(f_tilda)))
    f_t = jnp.exp(log_f)
    o_t = jax.nn.sigmoid(o_tilda)

    # m_t = max(log f_t + m_prev, log exp(i_tilda)) = max(log_f + m, i_tilda)
    m_t = jnp.maximum(log_f + m_prev, i_tilda)
    i_prime = jnp.exp(i_tilda - m_t)

    # Fold i_prime into v_t (H-sized op) before the H^2 outer product.
    iv = i_prime * v_t                                                 # (B, H)
    C_t = f_t[:, :, None] * C_prev + iv[:, :, None] * k_t[:, None, :]  # (B,H,H)
    n_t = f_t * n_prev + i_prime * k_t                                 # (B, H)

    # diag(n_t @ q_t.T) == rowwise dot(n_t, q_t)
    inner = jnp.sum(n_t * q_t, axis=-1, keepdims=True)                 # (B, 1)
    divisor = jnp.maximum(jnp.abs(inner), 1.0)

    # Reduce from the live C_t before it is stored (no C reload); divisor >= 1
    # so the approximate EUP reciprocal is numerically safe.
    h_tilda = jnp.sum(C_t * q_t[:, None, :], axis=-1) * pl.reciprocal(
        divisor, approx=True)
    h_t = o_t * h_tilda
    return h_t, C_t, n_t, m_t


# ---------------------------------------------------------------------------
# Tiling / VMEM helpers.
# ---------------------------------------------------------------------------
def _vmem_limit_bytes(est_bytes):
    # Raise the default scoped VMEM limit (16/32 MiB) but stay well under the
    # smallest physical VMEM (64 MiB on v7x).
    return int(min(max(2 * est_bytes, 32 << 20), 56 << 20))


def _pick_cell_batch_tile(B, H, *, vmem_budget_bytes=24 << 20,
                          min_tile_bytes=1 << 20):
    c_row_bytes = 4 * H * H
    # C in + C out, each double-buffered -> ~4 resident copies of the C tile.
    max_tb = max(1, vmem_budget_bytes // (4 * c_row_bytes))
    tb = min(B, max_tb)
    # Prefer >=2 grid blocks (v7x 2-TC sharding) while keeping DMA-sized tiles.
    if tb == B and B > 1 and ((B + 1) // 2) * c_row_bytes >= min_tile_bytes:
        tb = (B + 1) // 2
    return tb


def _pick_seq_batch_tile(B, H, *, vmem_budget_bytes=24 << 20):
    c_row_bytes = 4 * H * H
    max_tb = max(1, vmem_budget_bytes // (2 * c_row_bytes))
    tb = 1
    for d in range(1, B + 1):          # largest divisor of B within budget
        if B % d == 0 and d <= max_tb:
            tb = d
    if tb == B and B > 1 and B % 2 == 0:
        tb = B // 2                    # >=2 parallel batch blocks for v7x
    return tb


# ---------------------------------------------------------------------------
# Kernel 1: single timestep (the module's forward), batch-tiled.
# ---------------------------------------------------------------------------
def _mlstm_cell_kernel(x_ref, w_ref, b_ref, c_ref, n_ref, m_ref,
                       h_out, c_out, n_out, m_out):
    # One MXU matmul for all six projections + one wide bias add.
    z = jnp.dot(x_ref[...], w_ref[...],
                preferred_element_type=jnp.float32) + b_ref[...]
    h_t, C_t, n_t, m_t = _mlstm_gate_math(z, c_ref[...], n_ref[...], m_ref[...])
    h_out[...] = h_t
    c_out[...] = C_t
    n_out[...] = n_t
    m_out[...] = m_t


@functools.partial(jax.jit, static_argnames=("block_b",))
def mlstm_cell_forward(x, W_stacked, b_stacked, C, n, m, *, block_b=None):
    """One mLSTM cell step.  W_stacked must have W_k pre-scaled by 1/sqrt(H)."""
    B, I = x.shape
    H = n.shape[-1]
    b2d = b_stacked.reshape(1, 6 * H)

    tb = _pick_cell_batch_tile(B, H) if block_b is None else min(block_b, B)
    grid = (pl.cdiv(B, tb),)

    est = 4 * (tb * I + I * 6 * H + 6 * H + 2 * tb * H * H + 6 * tb * H)

    return pl.pallas_call(
        _mlstm_cell_kernel,
        out_shape=(
            jax.ShapeDtypeStruct((B, H), jnp.float32),      # h_t
            jax.ShapeDtypeStruct((B, H, H), jnp.float32),   # C_t
            jax.ShapeDtypeStruct((B, H), jnp.float32),      # n_t
            jax.ShapeDtypeStruct((B, H), jnp.float32),      # m_t
        ),
        grid=grid,
        in_specs=[
            pl.BlockSpec((tb, I), lambda i: (i, 0)),
            pl.BlockSpec((I, 6 * H), lambda i: (0, 0)),
            pl.BlockSpec((1, 6 * H), lambda i: (0, 0)),
            pl.BlockSpec((tb, H, H), lambda i: (i, 0, 0)),
            pl.BlockSpec((tb, H), lambda i: (i, 0)),
            pl.BlockSpec((tb, H), lambda i: (i, 0)),
        ],
        out_specs=[
            pl.BlockSpec((tb, H), lambda i: (i, 0)),
            pl.BlockSpec((tb, H, H), lambda i: (i, 0, 0)),
            pl.BlockSpec((tb, H), lambda i: (i, 0)),
            pl.BlockSpec((tb, H), lambda i: (i, 0)),
        ],
        # Update recurrent state in place (C -> C_t, n -> n_t, m -> m_t).
        input_output_aliases={3: 1, 4: 2, 5: 3},
        compiler_params=pltpu.CompilerParams(
            dimension_semantics=("parallel",),
            vmem_limit_bytes=_vmem_limit_bytes(est)),
    )(x, W_stacked, b2d, C, n, m)


# ---------------------------------------------------------------------------
# Kernel 2: whole sequence, batch-tiled, state resident in VMEM across time.
# ---------------------------------------------------------------------------
def _mlstm_seq_kernel(z_ref, c0_hbm, n0_hbm, m0_hbm,
                      h_out, c_out, n_out, m_out, sem):
    bi = pl.program_id(0)
    t = pl.program_id(1)
    tb = c_out.shape[0]

    # Seed the VMEM-resident state once per batch block.  C0/n0/m0 stay in
    # HBM (memory_space=ANY): they are read exactly once, so they must not
    # occupy pipelined VMEM buffers for the whole sequence.
    @pl.when(t == 0)
    def _():
        b0 = pl.multiple_of(bi * tb, tb)
        for src, dst in ((c0_hbm, c_out), (n0_hbm, n_out), (m0_hbm, m_out)):
            cp = pltpu.make_async_copy(src.at[pl.ds(b0, tb)], dst, sem)
            cp.start()
            cp.wait()

    h_t, C_t, n_t, m_t = _mlstm_gate_math(
        z_ref[0], c_out[...], n_out[...], m_out[...])

    h_out[0] = h_t
    c_out[...] = C_t      # constant block index over t -> stays in VMEM,
    n_out[...] = n_t      # written back to HBM only when bi changes / at end.
    m_out[...] = m_t


@functools.partial(jax.jit, static_argnames=("block_b",))
def mlstm_sequence_forward(xs, W_stacked, b_stacked, C0, n0, m0, *, block_b=None):
    """Run the mLSTM cell over xs: (T, B, I).  Returns (hs, C_T, n_T, m_T)."""
    T, B, I = xs.shape
    H = n0.shape[-1]

    # Hoist the tiny per-step projection out of the recurrence: one large
    # (T*B, I) x (I, 6H) matmul at near-peak MXU utilisation; the kernel then
    # streams Z_t blocks and is a pure VPU state update.
    Z = (jnp.dot(xs.reshape(T * B, I), W_stacked,
                 preferred_element_type=jnp.float32)
         + b_stacked.astype(jnp.float32)).reshape(T, B, 6 * H)

    if block_b is None:
        tb = _pick_seq_batch_tile(B, H)
    else:
        tb = min(block_b, B)
        assert B % tb == 0, "block_b must divide the batch for the sequence kernel"
    grid = (B // tb, T)

    est = 4 * (2 * tb * H * H + 4 * tb * 6 * H + 8 * tb * H)

    return pl.pallas_call(
        _mlstm_seq_kernel,
        out_shape=(
            jax.ShapeDtypeStruct((T, B, H), jnp.float32),   # h_t for every t
            jax.ShapeDtypeStruct((B, H, H), jnp.float32),   # final C
            jax.ShapeDtypeStruct((B, H), jnp.float32),      # final n
            jax.ShapeDtypeStruct((B, H), jnp.float32),      # final m
        ),
        grid=grid,
        in_specs=[
            pl.BlockSpec((1, tb, 6 * H), lambda bi, t: (t, bi, 0)),  # Z_t streamed
            pl.BlockSpec(memory_space=pl.ANY),                       # C0 (HBM)
            pl.BlockSpec(memory_space=pl.ANY),                       # n0 (HBM)
            pl.BlockSpec(memory_space=pl.ANY),                       # m0 (HBM)
        ],
        out_specs=[
            pl.BlockSpec((1, tb, H), lambda bi, t: (t, bi, 0)),      # h_t per step
            pl.BlockSpec((tb, H, H), lambda bi, t: (bi, 0, 0)),      # resident state
            pl.BlockSpec((tb, H), lambda bi, t: (bi, 0)),
            pl.BlockSpec((tb, H), lambda bi, t: (bi, 0)),
        ],
        scratch_shapes=[pltpu.SemaphoreType.DMA(())],
        compiler_params=pltpu.CompilerParams(
            dimension_semantics=("parallel", "arbitrary"),   # time innermost
            vmem_limit_bytes=_vmem_limit_bytes(est)),
    )(Z, C0, n0, m0)


# ---------------------------------------------------------------------------
# Parameter construction & pure-JAX reference (PyTorch semantics).
# ---------------------------------------------------------------------------
def _xavier_uniform(key, fan_in, fan_out):
    bound = jnp.sqrt(6.0 / (fan_in + fan_out))
    return jax.random.uniform(key, (fan_in, fan_out), jnp.float32,
                              minval=-bound, maxval=bound)


def fold_key_scale(W_stacked_raw, H):
    """Fold the 1/sqrt(H) key scale into the W_k columns (one-time)."""
    W = W_stacked_raw
    return jnp.concatenate(
        [W[:, :4 * H], W[:, 4 * H:5 * H] / jnp.sqrt(jnp.float32(H)), W[:, 5 * H:]],
        axis=1)


def _reference_step(x, W, b, C, n, m, H):
    """Pure-JAX mirror of the PyTorch forward (unscaled W, explicit /sqrt(H))."""
    def proj(idx):
        return x @ W[:, idx * H:(idx + 1) * H] + b[idx * H:(idx + 1) * H]
    i_tilda = proj(0)
    f_tilda = proj(1)
    o_tilda = proj(2)
    q_t = proj(3)
    k_t = x @ W[:, 4 * H:5 * H] / jnp.sqrt(jnp.float32(H)) + b[4 * H:5 * H]
    v_t = proj(5)
    f_t = jax.nn.sigmoid(f_tilda)
    o_t = jax.nn.sigmoid(o_tilda)
    m_t = jnp.maximum(jnp.log(f_t) + m, i_tilda)
    i_prime = jnp.exp(i_tilda - m_t)
    C_t = f_t[:, :, None] * C + i_prime[:, :, None] * jnp.einsum('bi,bk->bik', v_t, k_t)
    n_t = f_t * n + i_prime * k_t
    inner = jnp.sum(n_t * q_t, axis=-1)
    divisor = jnp.maximum(jnp.abs(inner), 1.0)
    h_tilda = jnp.einsum('bkj,bj->bk', C_t, q_t) / divisor[:, None]
    h_t = o_t * h_tilda
    return h_t, C_t, n_t, m_t


def _reference_sequence(xs, W, b, C0, n0, m0, H):
    def step(carry, x):
        C, n, m = carry
        h, C2, n2, m2 = _reference_step(x, W, b, C, n, m, H)
        return (C2, n2, m2), h
    (C_T, n_T, m_T), hs = jax.lax.scan(step, (C0, n0, m0), xs)
    return hs, C_T, n_T, m_T


if __name__ == "__main__":
    B, T, INPUT_SIZE, HIDDEN_SIZE = 16, 8, 16, 32

    key = jax.random.PRNGKey(0)
    k_x, k_xs, k_i, k_f, k_o, k_q, k_k, k_v = jax.random.split(key, 8)

    # Xavier-uniform weights like the PyTorch module; biases init to zero.
    W_i = _xavier_uniform(k_i, INPUT_SIZE, HIDDEN_SIZE)
    W_f = _xavier_uniform(k_f, INPUT_SIZE, HIDDEN_SIZE)
    W_o = _xavier_uniform(k_o, INPUT_SIZE, HIDDEN_SIZE)
    W_q = _xavier_uniform(k_q, INPUT_SIZE, HIDDEN_SIZE)
    W_k = _xavier_uniform(k_k, INPUT_SIZE, HIDDEN_SIZE)
    W_v = _xavier_uniform(k_v, INPUT_SIZE, HIDDEN_SIZE)
    W_raw = jnp.concatenate([W_i, W_f, W_o, W_q, W_k, W_v], axis=1)   # (I, 6H)
    W_kernel = fold_key_scale(W_raw, HIDDEN_SIZE)                     # k-scale folded
    b_stacked = jnp.zeros((6 * HIDDEN_SIZE,), jnp.float32)

    x = jax.random.normal(k_x, (B, INPUT_SIZE), jnp.float32)
    xs = jax.random.normal(k_xs, (T, B, INPUT_SIZE), jnp.float32)

    # init_hidden: zeros.
    C0 = jnp.zeros((B, HIDDEN_SIZE, HIDDEN_SIZE), jnp.float32)
    n0 = jnp.zeros((B, HIDDEN_SIZE), jnp.float32)
    m0 = jnp.zeros((B, HIDDEN_SIZE), jnp.float32)

    # --- per-step kernel (the module's forward) -----------------------------
    h_t, C_t, n_t, m_t = mlstm_cell_forward(x, W_kernel, b_stacked, C0, n0, m0)
    jax.block_until_ready((h_t, C_t, n_t, m_t))

    h_r, C_r, n_r, m_r = _reference_step(x, W_raw, b_stacked, C0, n0, m0, HIDDEN_SIZE)
    # h uses the approximate EUP reciprocal -> slightly looser tolerance.
    assert jnp.allclose(h_t, h_r, atol=2e-3, rtol=2e-3)
    assert jnp.allclose(C_t, C_r, atol=2e-5, rtol=2e-5)
    assert jnp.allclose(n_t, n_r, atol=2e-5, rtol=2e-5)
    assert jnp.allclose(m_t, m_r, atol=2e-5, rtol=2e-5)

    # --- sequence kernel (batch-tiled, state resident in VMEM over time) ----
    hs, C_T, n_T, m_T = mlstm_sequence_forward(xs, W_kernel, b_stacked, C0, n0, m0)
    jax.block_until_ready((hs, C_T, n_T, m_T))

    hs_r, C_Tr, n_Tr, m_Tr = _reference_sequence(
        xs, W_raw, b_stacked, C0, n0, m0, HIDDEN_SIZE)
    assert jnp.allclose(hs, hs_r, atol=2e-3, rtol=2e-3)
    assert jnp.allclose(C_T, C_Tr, atol=1e-4, rtol=1e-4)
    assert jnp.allclose(n_T, n_Tr, atol=1e-4, rtol=1e-4)
    assert jnp.allclose(m_T, m_Tr, atol=1e-4, rtol=1e-4)

    print("KERNEL_OK")
</pallas_src>

<mosaic_0001>
module attributes {stable_mosaic.version = 11 : i64} {
  func.func @_mlstm_cell_kernel(%arg0: i32, %arg1: memref<16x16xf32, #tpu.memory_space<vmem>>, %arg2: memref<16x192xf32, #tpu.memory_space<vmem>>, %arg3: memref<1x192xf32, #tpu.memory_space<vmem>>, %arg4: memref<16x32x32xf32, #tpu.memory_space<vmem>>, %arg5: memref<16x32xf32, #tpu.memory_space<vmem>>, %arg6: memref<16x32xf32, #tpu.memory_space<vmem>>, %arg7: memref<16x32xf32, #tpu.memory_space<vmem>>, %arg8: memref<16x32x32xf32, #tpu.memory_space<vmem>>, %arg9: memref<16x32xf32, #tpu.memory_space<vmem>>, %arg10: memref<16x32xf32, #tpu.memory_space<vmem>>) attributes {dimension_semantics = [#tpu.dimension_semantics<parallel>], iteration_bounds = array<i64: 1>, scalar_prefetch = 0 : i64, scratch_operands = 0 : i64, tpu.core_type = #tpu.core_type<tc>, window_params = [{transform_indices = @transform_0, window_bounds = array<i64: 16, 16>}, {pipeline_mode = #tpu.pipeline_mode<synchronous>, transform_indices = @transform_1, window_bounds = array<i64: 16, 192>}, {pipeline_mode = #tpu.pipeline_mode<synchronous>, transform_indices = @transform_2, window_bounds = array<i64: 1, 192>}, {transform_indices = @transform_3, window_bounds = array<i64: 16, 32, 32>}, {transform_indices = @transform_4, window_bounds = array<i64: 16, 32>}, {transform_indices = @transform_5, window_bounds = array<i64: 16, 32>}, {transform_indices = @transform_6, window_bounds = array<i64: 16, 32>}, {transform_indices = @transform_7, window_bounds = array<i64: 16, 32, 32>}, {transform_indices = @transform_8, window_bounds = array<i64: 16, 32>}, {transform_indices = @transform_9, window_bounds = array<i64: 16, 32>}]} {
    %c0 = arith.constant 0 : index
    %c0_0 = arith.constant 0 : index
    %0 = vector.load %arg1[%c0, %c0_0] : memref<16x16xf32, #tpu.memory_space<vmem>>, vector<16x16xf32>
    %c0_1 = arith.constant 0 : index
    %c0_2 = arith.constant 0 : index
    %1 = vector.load %arg2[%c0_1, %c0_2] : memref<16x192xf32, #tpu.memory_space<vmem>>, vector<16x192xf32>
    %cst = arith.constant dense<0.000000e+00> : vector<16x192xf32>
    %2 = tpu.matmul %0, %1, %cst {dimension_numbers = #tpu.dot_dimension_numbers<[1], [0], [0], [1], [0, 0, 1, 1], [], []>} : vector<16x16xf32>, vector<16x192xf32>, vector<16x192xf32> -> vector<16x192xf32>
    %c0_3 = arith.constant 0 : index
    %c0_4 = arith.constant 0 : index
    %3 = vector.load %arg3[%c0_3, %c0_4] : memref<1x192xf32, #tpu.memory_space<vmem>>, vector<1x192xf32>
    %4 = vector.broadcast %3 : vector<1x192xf32> to vector<16x192xf32>
    %5 = arith.addf %2, %4 : vector<16x192xf32>
    %c0_5 = arith.constant 0 : index
    %c0_6 = arith.constant 0 : index
    %c0_7 = arith.constant 0 : index
    %6 = vector.load %arg4[%c0_5, %c0_6, %c0_7] : memref<16x32x32xf32, #tpu.memory_space<vmem>>, vector<16x32x32xf32>
    %c0_8 = arith.constant 0 : index
    %c0_9 = arith.constant 0 : index
    %7 = vector.load %arg5[%c0_8, %c0_9] : memref<16x32xf32, #tpu.memory_space<vmem>>, vector<16x32xf32>
    %c0_10 = arith.constant 0 : index
    %c0_11 = arith.constant 0 : index
    %8 = vector.load %arg6[%c0_10, %c0_11] : memref<16x32xf32, #tpu.memory_space<vmem>>, vector<16x32xf32>
    %9 = vector.extract_strided_slice %5 {offsets = [0, 0], sizes = [16, 32], strides = [1, 1]} : vector<16x192xf32> to vector<16x32xf32>
    %10 = vector.extract_strided_slice %5 {offsets = [0, 32], sizes = [16, 32], strides = [1, 1]} : vector<16x192xf32> to vector<16x32xf32>
    %11 = vector.extract_strided_slice %5 {offsets = [0, 64], sizes = [16, 32], strides = [1, 1]} : vector<16x192xf32> to vector<16x32xf32>
    %12 = vector.extract_strided_slice %5 {offsets = [0, 96], sizes = [16, 32], strides = [1, 1]} : vector<16x192xf32> to vector<16x32xf32>
    %13 = vector.extract_strided_slice %5 {offsets = [0, 128], sizes = [16, 32], strides = [1, 1]} : vector<16x192xf32> to vector<16x32xf32>
    %14 = vector.extract_strided_slice %5 {offsets = [0, 160], sizes = [16, 32], strides = [1, 1]} : vector<16x192xf32> to vector<16x32xf32>
    %cst_12 = arith.constant 0.000000e+00 : f32
    %15 = vector.broadcast %cst_12 : f32 to vector<16x32xf32>
    %16 = arith.minimumf %10, %15 : vector<16x32xf32>
    %17 = math.absf %10 : vector<16x32xf32>
    %cst_13 = arith.constant 0.000000e+00 : f32
    %18 = vector.broadcast %cst_13 : f32 to vector<16x32xf32>
    %19 = arith.subf %18, %17 : vector<16x32xf32>
    %20 = math.exp %19 : vector<16x32xf32>
    %cst_14 = arith.constant 1.000000e+00 : f32
    %21 = vector.broadcast %cst_14 : f32 to vector<16x32xf32>
    %22 = arith.addf %21, %20 : vector<16x32xf32>
    %23 = math.log %22 : vector<16x32xf32>
    %24 = arith.subf %16, %23 : vector<16x32xf32>
    %25 = math.exp %24 : vector<16x32xf32>
    %26 = arith.negf %11 : vector<16x32xf32>
    %27 = math.exp %26 : vector<16x32xf32>
    %cst_15 = arith.constant 1.000000e+00 : f32
    %28 = vector.broadcast %cst_15 : f32 to vector<16x32xf32>
    %29 = arith.addf %28, %27 : vector<16x32xf32>
    %30 = arith.divf %28, %29 : vector<16x32xf32>
    %31 = arith.addf %24, %8 : vector<16x32xf32>
    %32 = arith.maximumf %31, %9 : vector<16x32xf32>
    %33 = arith.subf %9, %32 : vector<16x32xf32>
    %34 = math.exp %33 : vector<16x32xf32>
    %35 = arith.mulf %34, %14 : vector<16x32xf32>
    %36 = vector.shape_cast %25 : vector<16x32xf32> to vector<16x32x1xf32>
    %37 = vector.broadcast %36 : vector<16x32x1xf32> to vector<16x32x32xf32>
    %38 = arith.mulf %37, %6 : vector<16x32x32xf32>
    %39 = vector.shape_cast %35 : vector<16x32xf32> to vector<16x32x1xf32>
    %40 = vector.shape_cast %13 : vector<16x32xf32> to vector<16x1x32xf32>
    %41 = vector.broadcast %39 : vector<16x32x1xf32> to vector<16x32x32xf32>
    %42 = vector.broadcast %40 : vector<16x1x32xf32> to vector<16x32x32xf32>
    %43 = arith.mulf %41, %42 : vector<16x32x32xf32>
    %44 = arith.addf %38, %43 : vector<16x32x32xf32>
    %45 = arith.mulf %25, %7 : vector<16x32xf32>
    %46 = arith.mulf %34, %13 : vector<16x32xf32>
    %47 = arith.addf %45, %46 : vector<16x32xf32>
    %48 = arith.mulf %47, %12 : vector<16x32xf32>
    %cst_16 = arith.constant dense<0.000000e+00> : vector<16xf32>
    %49 = vector.multi_reduction <add>, %48, %cst_16 [1] : vector<16x32xf32> to vector<16xf32>
    %50 = vector.shape_cast %49 : vector<16xf32> to vector<16x1xf32>
    %51 = math.absf %50 : vector<16x1xf32>
    %cst_17 = arith.constant 1.000000e+00 : f32
    %52 = vector.broadcast %cst_17 : f32 to vector<16x1xf32>
    %53 = arith.maximumf %51, %52 : vector<16x1xf32>
    %54 = vector.shape_cast %12 : vector<16x32xf32> to vector<16x1x32xf32>
    %55 = vector.broadcast %54 : vector<16x1x32xf32> to vector<16x32x32xf32>
    %56 = arith.mulf %44, %55 : vector<16x32x32xf32>
    %cst_18 = arith.constant dense<0.000000e+00> : vector<16x32xf32>
    %57 = vector.multi_reduction <add>, %56, %cst_18 [2] : vector<16x32x32xf32> to vector<16x32xf32>
    %58 = tpu.reciprocal %53 {approx = true} : vector<16x1xf32> -> vector<16x1xf32>
    %59 = vector.broadcast %58 : vector<16x1xf32> to vector<16x32xf32>
    %60 = arith.mulf %57, %59 : vector<16x32xf32>
    %61 = arith.mulf %30, %60 : vector<16x32xf32>
    %c0_19 = arith.constant 0 : index
    %c0_20 = arith.constant 0 : index
    %62 = vector.load %arg7[%c0_19, %c0_20] : memref<16x32xf32, #tpu.memory_space<vmem>>, vector<16x32xf32>
    tpu.vector_store %arg7[%c0_19, %c0_20], %61 {strides = array<i32>} : memref<16x32xf32, #tpu.memory_space<vmem>>, vector<16x32xf32>,
    %c0_21 = arith.constant 0 : index
    %c0_22 = arith.constant 0 : index
    %c0_23 = arith.constant 0 : index
    %63 = vector.load %arg8[%c0_21, %c0_22, %c0_23] : memref<16x32x32xf32, #tpu.memory_space<vmem>>, vector<16x32x32xf32>
    tpu.vector_store %arg8[%c0_21, %c0_22, %c0_23], %44 {strides = array<i32>} : memref<16x32x32xf32, #tpu.memory_space<vmem>>, vector<16x32x32xf32>,
    %c0_24 = arith.constant 0 : index
    %c0_25 = arith.constant 0 : index
    %64 = vector.load %arg9[%c0_24, %c0_25] : memref<16x32xf32, #tpu.memory_space<vmem>>, vector<16x32xf32>
    tpu.vector_store %arg9[%c0_24, %c0_25], %47 {strides = array<i32>} : memref<16x32xf32, #tpu.memory_space<vmem>>, vector<16x32xf32>,
    %c0_26 = arith.constant 0 : index
    %c0_27 = arith.constant 0 : index
    %65 = vector.load %arg10[%c0_26, %c0_27] : memref<16x32xf32, #tpu.memory_space<vmem>>, vector<16x32xf32>
    tpu.vector_store %arg10[%c0_26, %c0_27], %32 {strides = array<i32>} : memref<16x32xf32, #tpu.memory_space<vmem>>, vector<16x32xf32>,
    return
  }
  func.func @transform_0(%arg0: i32) -> (i32, i32) {
    %c0_i32 = arith.constant 0 : i32
    %c0_i32_0 = arith.constant 0 : i32
    return %arg0, %c0_i32 : i32, i32
  }
  func.func @transform_1(%arg0: i32) -> (i32, i32) {
    %c0_i32 = arith.constant 0 : i32
    %c0_i32_0 = arith.constant 0 : i32
    %c0_i32_1 = arith.constant 0 : i32
    return %c0_i32, %c0_i32_0 : i32, i32
  }
  func.func @transform_2(%arg0: i32) -> (i32, i32) {
    %c0_i32 = arith.constant 0 : i32
    %c0_i32_0 = arith.constant 0 : i32
    %c0_i32_1 = arith.constant 0 : i32
    return %c0_i32, %c0_i32_0 : i32, i32
  }
  func.func @transform_3(%arg0: i32) -> (i32, i32, i32) {
    %c0_i32 = arith.constant 0 : i32
    %c0_i32_0 = arith.constant 0 : i32
    %c0_i32_1 = arith.constant 0 : i32
    return %arg0, %c0_i32, %c0_i32_0 : i32, i32, i32
  }
  func.func @transform_4(%arg0: i32) -> (i32, i32) {
    %c0_i32 = arith.constant 0 : i32
    %c0_i32_0 = arith.constant 0 : i32
    return %arg0, %c0_i32 : i32, i32
  }
  func.func @transform_5(%arg0: i32) -> (i32, i32) {
    %c0_i32 = arith.constant 0 : i32
    %c0_i32_0 = arith.constant 0 : i32
    return %arg0, %c0_i32 : i32, i32
  }
  func.func @transform_6(%arg0: i32) -> (i32, i32) {
    %c0_i32 = arith.constant 0 : i32
    %c0_i32_0 = arith.constant 0 : i32
    return %arg0, %c0_i32 : i32, i32
  }
  func.func @transform_7(%arg0: i32) -> (i32, i32, i32) {
    %c0_i32 = arith.constant 0 : i32
    %c0_i32_0 = arith.constant 0 : i32
    %c0_i32_1 = arith.constant 0 : i32
    return %arg0, %c0_i32, %c0_i32_0 : i32, i32, i32
  }
  func.func @transform_8(%arg0: i32) -> (i32, i32) {
    %c0_i32 = arith.constant 0 : i32
    %c0_i32_0 = arith.constant 0 : i32
    return %arg0, %c0_i32 : i32, i32
  }
  func.func @transform_9(%arg0: i32) -> (i32, i32) {
    %c0_i32 = arith.constant 0 : i32
    %c0_i32_0 = arith.constant 0 : i32
    return %arg0, %c0_i32 : i32, i32
  }
}

</mosaic_0001>

<llo_original>
// kernel: mlstm_cell_forward.1
$region0: #{mlstm_cell_forward.1}
  #allocation0 [shape = 'u32[]', space=smem, size = 0x4, offset = 0x4, fixed_abs, tag = 'smem constant byte address 0x4 - core index']
  #allocation1 [shape = 'u32[72,128]{1,0:T(1,128)}', space=vmem, size = 0x9000, scoped, tag = 'internal scratch']
  %s0 = inlined_call_operand.vmem [shape: f32[16,16], index: 0, kind: input, shape index: {}]
  %s1 = inlined_call_operand.vmem [shape: f32[16,192], index: 1, kind: input, shape index: {}]
  %s2 = inlined_call_operand.vmem [shape: f32[1,192], index: 2, kind: input, shape index: {}]
  %s3 = inlined_call_operand.hbm [shape: f32[16,32,32], index: 3, kind: input, shape index: {}, may-alias: {3,7}]
  %s4 = inlined_call_operand.hbm [shape: f32[16,32], index: 4, kind: input, shape index: {}, may-alias: {4,8}]
  %s5 = inlined_call_operand.hbm [shape: f32[16,32], index: 5, kind: input, shape index: {}, may-alias: {5,9}]
  %s6 = inlined_call_operand.hbm [shape: f32[16,32], index: 6, kind: output, shape index: {0}]
  %s7 = inlined_call_operand.hbm [shape: f32[16,32,32], index: 7, kind: output, shape index: {1}, may-alias: {3,7}]
  %s8 = inlined_call_operand.hbm [shape: f32[16,32], index: 8, kind: output, shape index: {2}, may-alias: {4,8}]
  %s9 = inlined_call_operand.hbm [shape: f32[16,32], index: 9, kind: output, shape index: {3}, may-alias: {5,9}]
  %10 = xla_tuple %s6, %s7, %s8, %s9
  %s11 = sld [smem:[#allocation0]]
  $region70: #{mlstm_cell_forward.1} parent=0
    _
  %s13 = ssub.s32 1, %s11
  %s14 = scalar_select 0, %s13, %s11
  $region1: #{mlstm_cell_forward.1} parent=0
    #allocation2 [shape = 'u8[262144]{0}', space=vmem, size = 0x40000, scoped, tag = 'input window, operand 3, single buffered']
    #allocation3 [shape = 's32[1]{0}', space=sflag, size = 0x4, scoped, tag = 'scoped memory for mlstm_cell_forward.1']
    #allocation4 [shape = 's32[1]{0}', space=sflag, size = 0x4, scoped, tag = 'scoped memory for mlstm_cell_forward.1']
    #allocation5 [shape = 'u8[8192]{0}', space=vmem, size = 0x2000, scoped, tag = 'input window, operand 4, single buffered']
    #allocation6 [shape = 's32[1]{0}', space=sflag, size = 0x4, scoped, tag = 'scoped memory for mlstm_cell_forward.1']
    #allocation7 [shape = 'u8[8192]{0}', space=vmem, size = 0x2000, scoped, tag = 'input window, operand 5, single buffered']
    #allocation8 [shape = 'u8[8192]{0}', space=vmem, size = 0x2000, scoped, tag = 'output window, operand 0, single buffered']
    #allocation9 [shape = 'u8[262144]{0}', space=vmem, size = 0x40000, scoped, tag = 'output window, operand 1, single buffered']
    #allocation10 [shape = 's32[1]{0}', space=sflag, size = 0x4, scoped, tag = 'scoped memory for mlstm_cell_forward.1']
    #allocation11 [shape = 'u8[8192]{0}', space=vmem, size = 0x2000, scoped, tag = 'output window, operand 2, single buffered']
    #allocation12 [shape = 'u8[8192]{0}', space=vmem, size = 0x2000, scoped, tag = 'output window, operand 3, single buffered']
    #allocation13 [shape = 's32[1]{0}', space=sflag, size = 0x4, scoped, tag = 'scoped memory for mlstm_cell_forward.1']
    %15 = vsyncpa [#allocation3], 0
    %16 = vsyncpa [#allocation6], 0
    %17 = vsyncpa [#allocation4], 0
    %18 = vsyncpa [#allocation10], 0
    %19 = vsyncpa [#allocation13], 0
    // Predicated region
    $region2: #{mlstm_cell_forward.1} parent=1 // pred_check
      _
    $region3: #{mlstm_cell_forward.1} parent=1 // pred_check_branch
      %21 = sbr.rel (0) target = $region5
    $region4: #{mlstm_cell_forward.1} parent=1 // pred_region
      _
    $region5: #{mlstm_cell_forward.1} parent=1 // pred_fallthru
      _
    // Predicated region
    $region6: #{mlstm_cell_forward.1} parent=1 // pred_check
      _
    $region7: #{mlstm_cell_forward.1} parent=1 // pred_check_branch
      %23 = sbr.rel (0) target = $region9
    $region8: #{mlstm_cell_forward.1} parent=1 // pred_region
      _
    $region9: #{mlstm_cell_forward.1} parent=1 // pred_fallthru
      _
    // Predicated region
    $region10: #{mlstm_cell_forward.1} parent=1 // pred_check
      _
    $region11: #{mlstm_cell_forward.1} parent=1 // pred_check_branch
      %25 = sbr.rel (0) target = $region13
    $region12: #{mlstm_cell_forward.1} parent=1 // pred_region
      _
    $region13: #{mlstm_cell_forward.1} parent=1 // pred_fallthru
      _
    // Predicated region
    $region14: #{mlstm_cell_forward.1} parent=1 // pred_check
      _
    $region15: #{mlstm_cell_forward.1} parent=1 // pred_check_branch
      %27 = sbr.rel (0) target = $region17
    $region16: #{mlstm_cell_forward.1} parent=1 // pred_region
      %29 = vsyncadd [#allocation3], 0
      %s30 = sshll.u32 %s3, 4
      %s31 = int_to_ptr.hbm [resolvable:$true] %s30
      %s32 = sshll.u32 [#allocation2], 4
      %s33 = int_to_ptr.vmem [resolvable:$true] %s32
      %38 = dma.hbm_to_vmem [thread:$0]  %s31, 8192, %s33, [#allocation3], 128, 128, 8
    $region17: #{mlstm_cell_forward.1} parent=1 // pred_fallthru
      _
    // Predicated region
    $region18: #{mlstm_cell_forward.1} parent=1 // pred_check
      _
    $region19: #{mlstm_cell_forward.1} parent=1 // pred_check_branch
      %40 = sbr.rel (0) target = $region21
    $region20: #{mlstm_cell_forward.1} parent=1 // pred_region
      %42 = vsyncadd [#allocation6], 0
      %s43 = sshll.u32 %s4, 4
      %s44 = int_to_ptr.hbm [resolvable:$true] %s43
      %s45 = sshll.u32 [#allocation5], 4
      %s46 = int_to_ptr.vmem [resolvable:$true] %s45
      %51 = dma.hbm_to_vmem [thread:$0]  %s44, 256, %s46, [#allocation6], 128, 128, 8
    $region21: #{mlstm_cell_forward.1} parent=1 // pred_fallthru
      _
    // Predicated region
    $region22: #{mlstm_cell_forward.1} parent=1 // pred_check
      _
    $region23: #{mlstm_cell_forward.1} parent=1 // pred_check_branch
      %53 = sbr.rel (0) target = $region25
    $region24: #{mlstm_cell_forward.1} parent=1 // pred_region
      %55 = vsyncadd [#allocation6], 0
      %s56 = sshll.u32 %s5, 4
      %s57 = int_to_ptr.hbm [resolvable:$true] %s56
      %s58 = sshll.u32 [#allocation7], 4
      %s59 = int_to_ptr.vmem [resolvable:$true] %s58
      %64 = dma.hbm_to_vmem [thread:$0]  %s57, 256, %s59, [#allocation6], 128, 128, 8
    $region25: #{mlstm_cell_forward.1} parent=1 // pred_fallthru
      _
    // Predicated region
    $region26: #{mlstm_cell_forward.1} parent=1 // pred_check
      _
    $region27: #{mlstm_cell_forward.1} parent=1 // pred_check_branch
      %66 = sbr.rel (0) target = $region29
    $region28: #{mlstm_cell_forward.1} parent=1 // pred_region
      %68 = dma.done [#allocation3], 8192
    $region29: #{mlstm_cell_forward.1} parent=1 // pred_fallthru
      _
    // Predicated region
    $region30: #{mlstm_cell_forward.1} parent=1 // pred_check
      _
    $region31: #{mlstm_cell_forward.1} parent=1 // pred_check_branch
      %70 = sbr.rel (0) target = $region33
    $region32: #{mlstm_cell_forward.1} parent=1 // pred_region
      %72 = dma.done [#allocation6], 256
    $region33: #{mlstm_cell_forward.1} parent=1 // pred_fallthru
      _
    // Predicated region
    $region34: #{mlstm_cell_forward.1} parent=1 // pred_check
      _
    $region35: #{mlstm_cell_forward.1} parent=1 // pred_check_branch
      %74 = sbr.rel (0) target = $region37
    $region36: #{mlstm_cell_forward.1} parent=1 // pred_region
      %76 = dma.done [#allocation6], 256
    $region37: #{mlstm_cell_forward.1} parent=1 // pred_fallthru
      _
    %v77 = vld [vmem:[%s0] sm:$0xff]
    %v78 = vld [vmem:[%s0 + $0x8] sm:$0xff]
    %v79 = vld [vmem:[%s1] sm:$0xff]
    %v80 = vld [vmem:[%s1 + $0x8] sm:$0xff]
    %v81 = vld [vmem:[%s1 + $0x10] sm:$0xff]
    %v82 = vld [vmem:[%s1 + $0x18] sm:$0xff]
    %v83 = vld [vmem:[%s2] sm:$0x3]
    %v85 = vperm.slane %v83, 0
    %v86 = vperm.slane %v83, 1
    %vm89 = vcmask 130048
    %v91 = vsel %vm89, %v77, 0
    %v94 = vsel %vm89, %v78, 0
    %96 = vmatpush.msra.mxu0 0.0
    %97 = vmatpush.msra.mxu0 0.0
    %98 = vmatpush.msra.mxu0 0.0
    %99 = vmatpush.msra.mxu0 0.0
    %100 = vmatpush.msra.mxu0 0.0
    %101 = vmatpush.msra.mxu0 0.0
    %102 = vmatpush.msra.mxu0 0.0
    %103 = vmatpush.msra.mxu0 0.0
    %104 = vmatpush.msra.mxu0 0.0
    %105 = vmatpush.msra.mxu0 0.0
    %106 = vmatpush.msra.mxu0 0.0
    %107 = vmatpush.msra.mxu0 0.0
    %108 = vmatpush.msra.mxu0 0.0
    %109 = vmatpush.msra.mxu0 0.0
    %110 = vmatpush.msra.mxu0 %v81
    %111 = vmatpush.msra.mxu0 %v79
    %112 = vmatmul.f32.gmra.mxu0 %v91
    %v113 = vpop.f32.mrf.mxu0
    %v114 = vadd.f32 %v85, %v113
    %115 = vmatmul.f32.gmra.mxu0 %v94
    %v116 = vpop.f32.mrf.mxu0
    %v117 = vadd.f32 %v85, %v116
    %118 = vdwg.mxu0
    %119 = vmatpush.msra.mxu0 0.0
    %120 = vmatpush.msra.mxu0 0.0
    %121 = vmatpush.msra.mxu0 0.0
    %122 = vmatpush.msra.mxu0 0.0
    %123 = vmatpush.msra.mxu0 0.0
    %124 = vmatpush.msra.mxu0 0.0
    %125 = vmatpush.msra.mxu0 0.0
    %126 = vmatpush.msra.mxu0 0.0
    %127 = vmatpush.msra.mxu0 0.0
    %128 = vmatpush.msra.mxu0 0.0
    %129 = vmatpush.msra.mxu0 0.0
    %130 = vmatpush.msra.mxu0 0.0
    %131 = vmatpush.msra.mxu0 0.0
    %132 = vmatpush.msra.mxu0 0.0
    %133 = vmatpush.msra.mxu0 %v82
    %134 = vmatpush.msra.mxu0 %v80
    %135 = vmatmul.f32.gmra.mxu0 %v91
    %v136 = vpop.f32.mrf.mxu0
    %v137 = vadd.f32 %v86, %v136
    %138 = vmatmul.f32.gmra.mxu0 %v94
    %v139 = vpop.f32.mrf.mxu0
    %v140 = vadd.f32 %v86, %v139
    %141 = vdwg.mxu0
    %v142 = vld [vmem:[#allocation2] sm:$0xff]
    %v143 = vld [vmem:[#allocation2 + $0x8] sm:$0xff]
    %v144 = vld [vmem:[#allocation2 + $0x10] sm:$0xff]
    %v145 = vld [vmem:[#allocation2 + $0x18] sm:$0xff]
    %v146 = vld [vmem:[#allocation2 + $0x20] sm:$0xff]
    %v147 = vld [vmem:[#allocation2 + $0x28] sm:$0xff]
    %v148 = vld [vmem:[#allocation2 + $0x30] sm:$0xff]
    %v149 = vld [vmem:[#allocation2 + $0x38] sm:$0xff]
    %v150 = vld [vmem:[#allocation2 + $0x40] sm:$0xff]
    %v151 = vld [vmem:[#allocation2 + $0x48] sm:$0xff]
    %v152 = vld [vmem:[#allocation2 + $0x50] sm:$0xff]
    %v153 = vld [vmem:[#allocation2 + $0x58] sm:$0xff]
    %v154 = vld [vmem:[#allocation2 + $0x60] sm:$0xff]
    %v155 = vld [vmem:[#allocation2 + $0x68] sm:$0xff]
    %v156 = vld [vmem:[#allocation2 + $0x70] sm:$0xff]
    %v157 = vld [vmem:[#allocation2 + $0x78] sm:$0xff]
    %v158 = vld [vmem:[#allocation2 + $0x80] sm:$0xff]
    %v159 = vld [vmem:[#allocation2 + $0x88] sm:$0xff]
    %v160 = vld [vmem:[#allocation2 + $0x90] sm:$0xff]
    %v161 = vld [vmem:[#allocation2 + $0x98] sm:$0xff]
    %v162 = vld [vmem:[#allocation2 + $0xa0] sm:$0xff]
    %v163 = vld [vmem:[#allocation2 + $0xa8] sm:$0xff]
    %v164 = vld [vmem:[#allocation2 + $0xb0] sm:$0xff]
    %v165 = vld [vmem:[#allocation2 + $0xb8] sm:$0xff]
    %v166 = vld [vmem:[#allocation2 + $0xc0] sm:$0xff]
    %v167 = vld [vmem:[#allocation2 + $0xc8] sm:$0xff]
    %v168 = vld [vmem:[#allocation2 + $0xd0] sm:$0xff]
    %v169 = vld [vmem:[#allocation2 + $0xd8] sm:$0xff]
    %v170 = vld [vmem:[#allocation2 + $0xe0] sm:$0xff]
    %v171 = vld [vmem:[#allocation2 + $0xe8] sm:$0xff]
    %v172 = vld [vmem:[#allocation2 + $0xf0] sm:$0xff]
    %v173 = vld [vmem:[#allocation2 + $0xf8] sm:$0xff]
    %v174 = vld [vmem:[#allocation2 + $0x100] sm:$0xff]
    %v175 = vld [vmem:[#allocation2 + $0x108] sm:$0xff]
    %v176 = vld [vmem:[#allocation2 + $0x110] sm:$0xff]
    %v177 = vld [vmem:[#allocation2 + $0x118] sm:$0xff]
    %v178 = vld [vmem:[#allocation2 + $0x120] sm:$0xff]
    %v179 = vld [vmem:[#allocation2 + $0x128] sm:$0xff]
    %v180 = vld [vmem:[#allocation2 + $0x130] sm:$0xff]
    %v181 = vld [vmem:[#allocation2 + $0x138] sm:$0xff]
    %v182 = vld [vmem:[#allocation2 + $0x140] sm:$0xff]
    %v183 = vld [vmem:[#allocation2 + $0x148] sm:$0xff]
    %v184 = vld [vmem:[#allocation2 + $0x150] sm:$0xff]
    %v185 = vld [vmem:[#allocation2 + $0x158] sm:$0xff]
    %v186 = vld [vmem:[#allocation2 + $0x160] sm:$0xff]
    %v187 = vld [vmem:[#allocation2 + $0x168] sm:$0xff]
    %v188 = vld [vmem:[#allocation2 + $0x170] sm:$0xff]
    %v189 = vld [vmem:[#allocation2 + $0x178] sm:$0xff]
    %v190 = vld [vmem:[#allocation2 + $0x180] sm:$0xff]
    %v191 = vld [vmem:[#allocation2 + $0x188] sm:$0xff]
    %v192 = vld [vmem:[#allocation2 + $0x190] sm:$0xff]
    %v193 = vld [vmem:[#allocation2 + $0x198] sm:$0xff]
    %v194 = vld [vmem:[#allocation2 + $0x1a0] sm:$0xff]
    %v195 = vld [vmem:[#allocation2 + $0x1a8] sm:$0xff]
    %v196 = vld [vmem:[#allocation2 + $0x1b0] sm:$0xff]
    %v197 = vld [vmem:[#allocation2 + $0x1b8] sm:$0xff]
    %v198 = vld [vmem:[#allocation2 + $0x1c0] sm:$0xff]
    %v199 = vld [vmem:[#allocation2 + $0x1c8] sm:$0xff]
    %v200 = vld [vmem:[#allocation2 + $0x1d0] sm:$0xff]
    %v201 = vld [vmem:[#allocation2 + $0x1d8] sm:$0xff]
    %v202 = vld [vmem:[#allocation2 + $0x1e0] sm:$0xff]
    %v203 = vld [vmem:[#allocation2 + $0x1e8] sm:$0xff]
    %v204 = vld [vmem:[#allocation2 + $0x1f0] sm:$0xff]
    %v205 = vld [vmem:[#allocation2 + $0x1f8] sm:$0xff]
    %v206 = vld [vmem:[#allocation5] sm:$0xff]
    %v207 = vld [vmem:[#allocation5 + $0x8] sm:$0xff]
    %v208 = vld [vmem:[#allocation7] sm:$0xff]
    %v209 = vld [vmem:[#allocation7 + $0x8] sm:$0xff]
    %v210 = vmin.f32 %v114, 0.0
    %v211 = vmin.f32 %v117, 0.0
    %v212 = vand.u32 2147483647, %v114
    %v213 = vand.u32 2147483647, %v117
    %v214 = vsub.f32 0.0, %v212
    %v215 = vsub.f32 0.0, %v213
    %v216 = vmul.f32 %v214, 1.442695
    %v217 = vpow.pop %v216
    %v218 = vmul.f32 %v215, 1.442695
    %v219 = vpow.pop %v218
    %v220 = vadd.f32 %v217, 1.0
    %v221 = vadd.f32 %v219, 1.0
    %v222 = vlog2.pop %v220
    %v223 = vmul.f32 %v222, 0.6931472
    %v224 = vlog2.pop %v221
    %v225 = vmul.f32 %v224, 0.6931472
    %v226 = vsub.f32 %v210, %v223
    %v227 = vsub.f32 %v211, %v225
    %v228 = vmul.f32 %v226, 1.442695
    %v229 = vpow.pop %v228
    %v230 = vmul.f32 %v227, 1.442695
    %v231 = vpow.pop %v230
    %v232 = vxor.u32 %v114, 2147483648
    %v233 = vxor.u32 %v117, 2147483648
    %v234 = vmul.f32 %v232, 1.442695
    %v235 = vpow.pop %v234
    %v236 = vmul.f32 %v233, 1.442695
    %v237 = vpow.pop %v236
    %v238 = vadd.f32 %v235, 1.0
    %v239 = vadd.f32 %v237, 1.0
    %v240 = vrcp.pop %v238
    %v241 = vmul.f32 %v238, %v240
    %v242 = vsub.f32 1.0, %v241
    %v243 = vmul.f32 %v240, %v242
    %v244 = vadd.f32 %v240, %v243
    %vm245 = vweird.f32 %v238
    %vm246 = vweird.f32 %v240
    %vm247 = vmor %vm245, %vm246
    %v248 = vsel %vm247, %v240, %v244
    %v249 = vand.u32 2147483647, %v238
    %vm250 = vcmp.eq.f32.partialorder %v249, 8.507059e+37
    %v251 = vand.u32 %v238, 2147483648
    %v252 = vor.u32 1.1754944e-38, %v251
    %v253 = vsel %vm250, %v252, %v248
    %v254 = vmul.f32 1.0, %v253
    %v255 = vrcp.pop %v239
    %v256 = vmul.f32 %v239, %v255
    %v257 = vsub.f32 1.0, %v256
    %v258 = vmul.f32 %v255, %v257
    %v259 = vadd.f32 %v255, %v258
    %vm260 = vweird.f32 %v239
    %vm261 = vweird.f32 %v255
    %vm262 = vmor %vm260, %vm261
    %v263 = vsel %vm262, %v255, %v259
    %v264 = vand.u32 2147483647, %v239
    %vm265 = vcmp.eq.f32.partialorder %v264, 8.507059e+37
    %v266 = vand.u32 %v239, 2147483648
    %v267 = vor.u32 1.1754944e-38, %v266
    %v268 = vsel %vm265, %v267, %v263
    %v269 = vmul.f32 1.0, %v268
    %272 = vrot.lane.b32.xlu0 %v208, 32
    %v273 = vpop.permute.xlu0 %272
    %274 = vrot.lane.b32.xlu0 %v209, 32
    %v275 = vpop.permute.xlu0 %274
    %v278 = vadd.f32 %v226, %v273
    %v279 = vadd.f32 %v227, %v275
    %282 = vrot.lane.b32.xlu0 %v114, 32
    %v283 = vpop.permute.xlu0 %282
    %284 = vrot.lane.b32.xlu0 %v117, 32
    %v285 = vpop.permute.xlu0 %284
    %v288 = vmax.f32 %v278, %v283
    %v289 = vmax.f32 %v279, %v285
    %292 = vrot.lane.b32.xlu0 %v288, 96
    %v293 = vpop.permute.xlu0 %292
    %294 = vrot.lane.b32.xlu0 %v289, 96
    %v295 = vpop.permute.xlu0 %294
    %v298 = vsub.f32 %v114, %v293
    %v299 = vsub.f32 %v117, %v295
    %v300 = vmul.f32 %v298, 1.442695
    %v301 = vpow.pop %v300
    %v302 = vmul.f32 %v299, 1.442695
    %v303 = vpow.pop %v302
    %306 = vrot.lane.b32.xlu0 %v137, 96
    %v307 = vpop.permute.xlu0 %306
    %308 = vrot.lane.b32.xlu0 %v140, 96
    %v309 = vpop.permute.xlu0 %308
    %v312 = vmul.f32 %v301, %v307
    %v313 = vmul.f32 %v303, %v309
    %v314 = vperm.slane %v229, 0
    %v315 = vlaneseq
    %v316 = vshrl.u32 %v315, 7
    %v317 = vadd.s32 %v316, 32
    %318 = vset.pattern.permute.xlu0 %v317
    %319 = vperm.xlu0 %318, %v314
    %v320 = vpop.permute.xlu0 %319
    %v321 = vlaneseq
    %v322 = vshrl.u32 %v321, 7
    %v323 = vadd.s32 %v322, 40
    %324 = vset.pattern.permute.xlu0 %v323
    %325 = vperm.xlu0 %324, %v314
    %v326 = vpop.permute.xlu0 %325
    %v327 = vlaneseq
    %v328 = vshrl.u32 %v327, 7
    %v329 = vadd.s32 %v328, 48
    %330 = vset.pattern.permute.xlu0 %v329
    %331 = vperm.xlu0 %330, %v314
    %v332 = vpop.permute.xlu0 %331
    %v333 = vlaneseq
    %v334 = vshrl.u32 %v333, 7
    %v335 = vadd.s32 %v334, 56
    %336 = vset.pattern.permute.xlu0 %v335
    %337 = vperm.xlu0 %336, %v314
    %v338 = vpop.permute.xlu0 %337
    %v339 = vperm.slane %v229, 1
    %v340 = vlaneseq
    %v341 = vshrl.u32 %v340, 7
    %v342 = vadd.s32 %v341, 32
    %343 = vset.pattern.permute.xlu0 %v342
    %344 = vperm.xlu0 %343, %v339
    %v345 = vpop.permute.xlu0 %344
    %v346 = vlaneseq
    %v347 = vshrl.u32 %v346, 7
    %v348 = vadd.s32 %v347, 40
    %349 = vset.pattern.permute.xlu0 %v348
    %350 = vperm.xlu0 %349, %v339
    %v351 = vpop.permute.xlu0 %350
    %v352 = vlaneseq
    %v353 = vshrl.u32 %v352, 7
    %v354 = vadd.s32 %v353, 48
    %355 = vset.pattern.permute.xlu0 %v354
    %356 = vperm.xlu0 %355, %v339
    %v357 = vpop.permute.xlu0 %356
    %v358 = vlaneseq
    %v359 = vshrl.u32 %v358, 7
    %v360 = vadd.s32 %v359, 56
    %361 = vset.pattern.permute.xlu0 %v360
    %362 = vperm.xlu0 %361, %v339
    %v363 = vpop.permute.xlu0 %362
    %v364 = vperm.slane %v229, 2
    %v365 = vlaneseq
    %v366 = vshrl.u32 %v365, 7
    %v367 = vadd.s32 %v366, 32
    %368 = vset.pattern.permute.xlu0 %v367
    %369 = vperm.xlu0 %368, %v364
    %v370 = vpop.permute.xlu0 %369
    %v371 = vlaneseq
    %v372 = vshrl.u32 %v371, 7
    %v373 = vadd.s32 %v372, 40
    %374 = vset.pattern.permute.xlu0 %v373
    %375 = vperm.xlu0 %374, %v364
    %v376 = vpop.permute.xlu0 %375
    %v377 = vlaneseq
    %v378 = vshrl.u32 %v377, 7
    %v379 = vadd.s32 %v378, 48
    %380 = vset.pattern.permute.xlu0 %v379
    %381 = vperm.xlu0 %380, %v364
    %v382 = vpop.permute.xlu0 %381
    %v383 = vlaneseq
    %v384 = vshrl.u32 %v383, 7
    %v385 = vadd.s32 %v384, 56
    %386 = vset.pattern.permute.xlu0 %v385
    %387 = vperm.xlu0 %386, %v364
    %v388 = vpop.permute.xlu0 %387
    %v389 = vperm.slane %v229, 3
    %v390 = vlaneseq
    %v391 = vshrl.u32 %v390, 7
    %v392 = vadd.s32 %v391, 32
    %393 = vset.pattern.permute.xlu0 %v392
    %394 = vperm.xlu0 %393, %v389
    %v395 = vpop.permute.xlu0 %394
    %v396 = vlaneseq
    %v397 = vshrl.u32 %v396, 7
    %v398 = vadd.s32 %v397, 40
    %399 = vset.pattern.permute.xlu0 %v398
    %400 = vperm.xlu0 %399, %v389
    %v401 = vpop.permute.xlu0 %400
    %v402 = vlaneseq
    %v403 = vshrl.u32 %v402, 7
    %v404 = vadd.s32 %v403, 48
    %405 = vset.pattern.permute.xlu0 %v404
    %406 = vperm.xlu0 %405, %v389
    %v407 = vpop.permute.xlu0 %406
    %v408 = vlaneseq
    %v409 = vshrl.u32 %v408, 7
    %v410 = vadd.s32 %v409, 56
    %411 = vset.pattern.permute.xlu0 %v410
    %412 = vperm.xlu0 %411, %v389
    %v413 = vpop.permute.xlu0 %412
    %v414 = vperm.slane %v229, 4
    %v415 = vlaneseq
    %v416 = vshrl.u32 %v415, 7
    %v417 = vadd.s32 %v416, 32
    %418 = vset.pattern.permute.xlu0 %v417
    %419 = vperm.xlu0 %418, %v414
    %v420 = vpop.permute.xlu0 %419
    %v421 = vlaneseq
    %v422 = vshrl.u32 %v421, 7
    %v423 = vadd.s32 %v422, 40
    %424 = vset.pattern.permute.xlu0 %v423
    %425 = vperm.xlu0 %424, %v414
    %v426 = vpop.permute.xlu0 %425
    %v427 = vlaneseq
    %v428 = vshrl.u32 %v427, 7
    %v429 = vadd.s32 %v428, 48
    %430 = vset.pattern.permute.xlu0 %v429
    %431 = vperm.xlu0 %430, %v414
    %v432 = vpop.permute.xlu0 %431
    %v433 = vlaneseq
    %v434 = vshrl.u32 %v433, 7
    %v435 = vadd.s32 %v434, 56
    %436 = vset.pattern.permute.xlu0 %v435
    %437 = vperm.xlu0 %436, %v414
    %v438 = vpop.permute.xlu0 %437
    %v439 = vperm.slane %v229, 5
    %v440 = vlaneseq
    %v441 = vshrl.u32 %v440, 7
    %v442 = vadd.s32 %v441, 32
    %443 = vset.pattern.permute.xlu0 %v442
    %444 = vperm.xlu0 %443, %v439
    %v445 = vpop.permute.xlu0 %444
    %v446 = vlaneseq
    %v447 = vshrl.u32 %v446, 7
    %v448 = vadd.s32 %v447, 40
    %449 = vset.pattern.permute.xlu0 %v448
    %450 = vperm.xlu0 %449, %v439
    %v451 = vpop.permute.xlu0 %450
    %v452 = vlaneseq
    %v453 = vshrl.u32 %v452, 7
    %v454 = vadd.s32 %v453, 48
    %455 = vset.pattern.permute.xlu0 %v454
    %456 = vperm.xlu0 %455, %v439
    %v457 = vpop.permute.xlu0 %456
    %v458 = vlaneseq
    %v459 = vshrl.u32 %v458, 7
    %v460 = vadd.s32 %v459, 56
    %461 = vset.pattern.permute.xlu0 %v460
    %462 = vperm.xlu0 %461, %v439
    %v463 = vpop.permute.xlu0 %462
    %v464 = vperm.slane %v229, 6
    %v465 = vlaneseq
    %v466 = vshrl.u32 %v465, 7
    %v467 = vadd.s32 %v466, 32
    %468 = vset.pattern.permute.xlu0 %v467
    %469 = vperm.xlu0 %468, %v464
    %v470 = vpop.permute.xlu0 %469
    %v471 = vlaneseq
    %v472 = vshrl.u32 %v471, 7
    %v473 = vadd.s32 %v472, 40
    %474 = vset.pattern.permute.xlu0 %v473
    %475 = vperm.xlu0 %474, %v464
    %v476 = vpop.permute.xlu0 %475
    %v477 = vlaneseq
    %v478 = vshrl.u32 %v477, 7
    %v479 = vadd.s32 %v478, 48
    %480 = vset.pattern.permute.xlu0 %v479
    %481 = vperm.xlu0 %480, %v464
    %v482 = vpop.permute.xlu0 %481
    %v483 = vlaneseq
    %v484 = vshrl.u32 %v483, 7
    %v485 = vadd.s32 %v484, 56
    %486 = vset.pattern.permute.xlu0 %v485
    %487 = vperm.xlu0 %486, %v464
    %v488 = vpop.permute.xlu0 %487
    %v489 = vperm.slane %v229, 7
    %v490 = vlaneseq
    %v491 = vshrl.u32 %v490, 7
    %v492 = vadd.s32 %v491, 32
    %493 = vset.pattern.permute.xlu0 %v492
    %494 = vperm.xlu0 %493, %v489
    %v495 = vpop.permute.xlu0 %494
    %v496 = vlaneseq
    %v497 = vshrl.u32 %v496, 7
    %v498 = vadd.s32 %v497, 40
    %499 = vset.pattern.permute.xlu0 %v498
    %500 = vperm.xlu0 %499, %v489
    %v501 = vpop.permute.xlu0 %500
    %v502 = vlaneseq
    %v503 = vshrl.u32 %v502, 7
    %v504 = vadd.s32 %v503, 48
    %505 = vset.pattern.permute.xlu0 %v504
    %506 = vperm.xlu0 %505, %v489
    %v507 = vpop.permute.xlu0 %506
    %v508 = vlaneseq
    %v509 = vshrl.u32 %v508, 7
    %v510 = vadd.s32 %v509, 56
    %511 = vset.pattern.permute.xlu0 %v510
    %512 = vperm.xlu0 %511, %v489
    %v513 = vpop.permute.xlu0 %512
    %v514 = vperm.slane %v231, 0
    %v515 = vlaneseq
    %v516 = vshrl.u32 %v515, 7
    %v517 = vadd.s32 %v516, 32
    %518 = vset.pattern.permute.xlu0 %v517
    %519 = vperm.xlu0 %518, %v514
    %v520 = vpop.permute.xlu0 %519
    %v521 = vlaneseq
    %v522 = vshrl.u32 %v521, 7
    %v523 = vadd.s32 %v522, 40
    %524 = vset.pattern.permute.xlu0 %v523
    %525 = vperm.xlu0 %524, %v514
    %v526 = vpop.permute.xlu0 %525
    %v527 = vlaneseq
    %v528 = vshrl.u32 %v527, 7
    %v529 = vadd.s32 %v528, 48
    %530 = vset.pattern.permute.xlu0 %v529
    %531 = vperm.xlu0 %530, %v514
    %v532 = vpop.permute.xlu0 %531
    %v533 = vlaneseq
    %v534 = vshrl.u32 %v533, 7
    %v535 = vadd.s32 %v534, 56
    %536 = vset.pattern.permute.xlu0 %v535
    %537 = vperm.xlu0 %536, %v514
    %v538 = vpop.permute.xlu0 %537
    %v539 = vperm.slane %v231, 1
    %v540 = vlaneseq
    %v541 = vshrl.u32 %v540, 7
    %v542 = vadd.s32 %v541, 32
    %543 = vset.pattern.permute.xlu0 %v542
    %544 = vperm.xlu0 %543, %v539
    %v545 = vpop.permute.xlu0 %544
    %v546 = vlaneseq
    %v547 = vshrl.u32 %v546, 7
    %v548 = vadd.s32 %v547, 40
    %549 = vset.pattern.permute.xlu0 %v548
    %550 = vperm.xlu0 %549, %v539
    %v551 = vpop.permute.xlu0 %550
    %v552 = vlaneseq
    %v553 = vshrl.u32 %v552, 7
    %v554 = vadd.s32 %v553, 48
    %555 = vset.pattern.permute.xlu0 %v554
    %556 = vperm.xlu0 %555, %v539
    %v557 = vpop.permute.xlu0 %556
    %v558 = vlaneseq
    %v559 = vshrl.u32 %v558, 7
    %v560 = vadd.s32 %v559, 56
    %561 = vset.pattern.permute.xlu0 %v560
    %562 = vperm.xlu0 %561, %v539
    %v563 = vpop.permute.xlu0 %562
    %v564 = vperm.slane %v231, 2
    %v565 = vlaneseq
    %v566 = vshrl.u32 %v565, 7
    %v567 = vadd.s32 %v566, 32
    %568 = vset.pattern.permute.xlu0 %v567
    %569 = vperm.xlu0 %568, %v564
    %v570 = vpop.permute.xlu0 %569
    %v571 = vlaneseq
    %v572 = vshrl.u32 %v571, 7
    %v573 = vadd.s32 %v572, 40
    %574 = vset.pattern.permute.xlu0 %v573
    %575 = vperm.xlu0 %574, %v564
    %v576 = vpop.permute.xlu0 %575
    %v577 = vlaneseq
    %v578 = vshrl.u32 %v577, 7
    %v579 = vadd.s32 %v578, 48
    %580 = vset.pattern.permute.xlu0 %v579
    %581 = vperm.xlu0 %580, %v564
    %v582 = vpop.permute.xlu0 %581
    %v583 = vlaneseq
    %v584 = vshrl.u32 %v583, 7
    %v585 = vadd.s32 %v584, 56
    %586 = vset.pattern.permute.xlu0 %v585
    %587 = vperm.xlu0 %586, %v564
    %v588 = vpop.permute.xlu0 %587
    %v589 = vperm.slane %v231, 3
    %v590 = vlaneseq
    %v591 = vshrl.u32 %v590, 7
    %v592 = vadd.s32 %v591, 32
    %593 = vset.pattern.permute.xlu0 %v592
    %594 = vperm.xlu0 %593, %v589
    %v595 = vpop.permute.xlu0 %594
    %v596 = vlaneseq
    %v597 = vshrl.u32 %v596, 7
    %v598 = vadd.s32 %v597, 40
    %599 = vset.pattern.permute.xlu0 %v598
    %600 = vperm.xlu0 %599, %v589
    %v601 = vpop.permute.xlu0 %600
    %v602 = vlaneseq
    %v603 = vshrl.u32 %v602, 7
    %v604 = vadd.s32 %v603, 48
    %605 = vset.pattern.permute.xlu0 %v604
    %606 = vperm.xlu0 %605, %v589
    %v607 = vpop.permute.xlu0 %606
    %v608 = vlaneseq
    %v609 = vshrl.u32 %v608, 7
    %v610 = vadd.s32 %v609, 56
    %611 = vset.pattern.permute.xlu0 %v610
    %612 = vperm.xlu0 %611, %v589
    %v613 = vpop.permute.xlu0 %612
    %v614 = vperm.slane %v231, 4
    %v615 = vlaneseq
    %v616 = vshrl.u32 %v615, 7
    %v617 = vadd.s32 %v616, 32
    %618 = vset.pattern.permute.xlu0 %v617
    %619 = vperm.xlu0 %618, %v614
    %v620 = vpop.permute.xlu0 %619
    %v621 = vlaneseq
    %v622 = vshrl.u32 %v621, 7
    %v623 = vadd.s32 %v622, 40
    %624 = vset.pattern.permute.xlu0 %v623
    %625 = vperm.xlu0 %624, %v614
    %v626 = vpop.permute.xlu0 %625
    %v627 = vlaneseq
    %v628 = vshrl.u32 %v627, 7
    %v629 = vadd.s32 %v628, 48
    %630 = vset.pattern.permute.xlu0 %v629
    %631 = vperm.xlu0 %630, %v614
    %v632 = vpop.permute.xlu0 %631
    %v633 = vlaneseq
    %v634 = vshrl.u32 %v633, 7
    %v635 = vadd.s32 %v634, 56
    %636 = vset.pattern.permute.xlu0 %v635
    %637 = vperm.xlu0 %636, %v614
    %v638 = vpop.permute.xlu0 %637
    %v639 = vperm.slane %v231, 5
    %v640 = vlaneseq
    %v641 = vshrl.u32 %v640, 7
    %v642 = vadd.s32 %v641, 32
    %643 = vset.pattern.permute.xlu0 %v642
    %644 = vperm.xlu0 %643, %v639
    %v645 = vpop.permute.xlu0 %644
    %v646 = vlaneseq
    %v647 = vshrl.u32 %v646, 7
    %v648 = vadd.s32 %v647, 40
    %649 = vset.pattern.permute.xlu0 %v648
    %650 = vperm.xlu0 %649, %v639
    %v651 = vpop.permute.xlu0 %650
    %v652 = vlaneseq
    %v653 = vshrl.u32 %v652, 7
    %v654 = vadd.s32 %v653, 48
    %655 = vset.pattern.permute.xlu0 %v654
    %656 = vperm.xlu0 %655, %v639
    %v657 = vpop.permute.xlu0 %656
    %v658 = vlaneseq
    %v659 = vshrl.u32 %v658, 7
    %v660 = vadd.s32 %v659, 56
    %661 = vset.pattern.permute.xlu0 %v660
    %662 = vperm.xlu0 %661, %v639
    %v663 = vpop.permute.xlu0 %662
    %v664 = vperm.slane %v231, 6
    %v665 = vlaneseq
    %v666 = vshrl.u32 %v665, 7
    %v667 = vadd.s32 %v666, 32
    %668 = vset.pattern.permute.xlu0 %v667
    %669 = vperm.xlu0 %668, %v664
    %v670 = vpop.permute.xlu0 %669
    %v671 = vlaneseq
    %v672 = vshrl.u32 %v671, 7
    %v673 = vadd.s32 %v672, 40
    %674 = vset.pattern.permute.xlu0 %v673
    %675 = vperm.xlu0 %674, %v664
    %v676 = vpop.permute.xlu0 %675
    %v677 = vlaneseq
    %v678 = vshrl.u32 %v677, 7
    %v679 = vadd.s32 %v678, 48
    %680 = vset.pattern.permute.xlu0 %v679
    %681 = vperm.xlu0 %680, %v664
    %v682 = vpop.permute.xlu0 %681
    %v683 = vlaneseq
    %v684 = vshrl.u32 %v683, 7
    %v685 = vadd.s32 %v684, 56
    %686 = vset.pattern.permute.xlu0 %v685
    %687 = vperm.xlu0 %686, %v664
    %v688 = vpop.permute.xlu0 %687
    %v689 = vperm.slane %v231, 7
    %v690 = vlaneseq
    %v691 = vshrl.u32 %v690, 7
    %v692 = vadd.s32 %v691, 32
    %693 = vset.pattern.permute.xlu0 %v692
    %694 = vperm.xlu0 %693, %v689
    %v695 = vpop.permute.xlu0 %694
    %v696 = vlaneseq
    %v697 = vshrl.u32 %v696, 7
    %v698 = vadd.s32 %v697, 40
    %699 = vset.pattern.permute.xlu0 %v698
    %700 = vperm.xlu0 %699, %v689
    %v701 = vpop.permute.xlu0 %700
    %v702 = vlaneseq
    %v703 = vshrl.u32 %v702, 7
    %v704 = vadd.s32 %v703, 48
    %705 = vset.pattern.permute.xlu0 %v704
    %706 = vperm.xlu0 %705, %v689
    %v707 = vpop.permute.xlu0 %706
    %v708 = vlaneseq
    %v709 = vshrl.u32 %v708, 7
    %v710 = vadd.s32 %v709, 56
    %711 = vset.pattern.permute.xlu0 %v710
    %712 = vperm.xlu0 %711, %v689
    %v713 = vpop.permute.xlu0 %712
    %v714 = vmul.f32 %v320, %v142
    %v715 = vmul.f32 %v326, %v143
    %v716 = vmul.f32 %v332, %v144
    %v717 = vmul.f32 %v338, %v145
    %v718 = vmul.f32 %v345, %v146
    %v719 = vmul.f32 %v351, %v147
    %v720 = vmul.f32 %v357, %v148
    %v721 = vmul.f32 %v363, %v149
    %v722 = vmul.f32 %v370, %v150
    %v723 = vmul.f32 %v376, %v151
    %v724 = vmul.f32 %v382, %v152
    %v725 = vmul.f32 %v388, %v153
    %v726 = vmul.f32 %v395, %v154
    %v727 = vmul.f32 %v401, %v155
    %v728 = vmul.f32 %v407, %v156
    %v729 = vmul.f32 %v413, %v157
    %v730 = vmul.f32 %v420, %v158
    %v731 = vmul.f32 %v426, %v159
    %v732 = vmul.f32 %v432, %v160
    %v733 = vmul.f32 %v438, %v161
    %v734 = vmul.f32 %v445, %v162
    %v735 = vmul.f32 %v451, %v163
    %v736 = vmul.f32 %v457, %v164
    %v737 = vmul.f32 %v463, %v165
    %v738 = vmul.f32 %v470, %v166
    %v739 = vmul.f32 %v476, %v167
    %v740 = vmul.f32 %v482, %v168
    %v741 = vmul.f32 %v488, %v169
    %v742 = vmul.f32 %v495, %v170
    %v743 = vmul.f32 %v501, %v171
    %v744 = vmul.f32 %v507, %v172
    %v745 = vmul.f32 %v513, %v173
    %v746 = vmul.f32 %v520, %v174
    %v747 = vmul.f32 %v526, %v175
    %v748 = vmul.f32 %v532, %v176
    %v749 = vmul.f32 %v538, %v177
    %v750 = vmul.f32 %v545, %v178
    %v751 = vmul.f32 %v551, %v179
    %v752 = vmul.f32 %v557, %v180
    %v753 = vmul.f32 %v563, %v181
    %v754 = vmul.f32 %v570, %v182
    %v755 = vmul.f32 %v576, %v183
    %v756 = vmul.f32 %v582, %v184
    %v757 = vmul.f32 %v588, %v185
    %v758 = vmul.f32 %v595, %v186
    %v759 = vmul.f32 %v601, %v187
    %v760 = vmul.f32 %v607, %v188
    %v761 = vmul.f32 %v613, %v189
    %v762 = vmul.f32 %v620, %v190
    %v763 = vmul.f32 %v626, %v191
    %v764 = vmul.f32 %v632, %v192
    %v765 = vmul.f32 %v638, %v193
    %v766 = vmul.f32 %v645, %v194
    %v767 = vmul.f32 %v651, %v195
    %v768 = vmul.f32 %v657, %v196
    %v769 = vmul.f32 %v663, %v197
    %v770 = vmul.f32 %v670, %v198
    %v771 = vmul.f32 %v676, %v199
    %v772 = vmul.f32 %v682, %v200
    %v773 = vmul.f32 %v688, %v201
    %v774 = vmul.f32 %v695, %v202
    %v775 = vmul.f32 %v701, %v203
    %v776 = vmul.f32 %v707, %v204
    %v777 = vmul.f32 %v713, %v205
    %v778 = vperm.slane %v312, 0
    %v779 = vlaneseq
    %v780 = vshrl.u32 %v779, 7
    %782 = vset.pattern.permute.xlu0 %v780
    %783 = vperm.xlu0 %782, %v778
    %v784 = vpop.permute.xlu0 %783
    %v785 = vlaneseq
    %v786 = vshrl.u32 %v785, 7
    %v787 = vadd.s32 %v786, 8
    %788 = vset.pattern.permute.xlu0 %v787
    %789 = vperm.xlu0 %788, %v778
    %v790 = vpop.permute.xlu0 %789
    %v791 = vlaneseq
    %v792 = vshrl.u32 %v791, 7
    %v793 = vadd.s32 %v792, 16
    %794 = vset.pattern.permute.xlu0 %v793
    %795 = vperm.xlu0 %794, %v778
    %v796 = vpop.permute.xlu0 %795
    %v797 = vlaneseq
    %v798 = vshrl.u32 %v797, 7
    %v799 = vadd.s32 %v798, 24
    %800 = vset.pattern.permute.xlu0 %v799
    %801 = vperm.xlu0 %800, %v778
    %v802 = vpop.permute.xlu0 %801
    %v803 = vperm.slane %v312, 1
    %v804 = vlaneseq
    %v805 = vshrl.u32 %v804, 7
    %807 = vset.pattern.permute.xlu0 %v805
    %808 = vperm.xlu0 %807, %v803
    %v809 = vpop.permute.xlu0 %808
    %v810 = vlaneseq
    %v811 = vshrl.u32 %v810, 7
    %v812 = vadd.s32 %v811, 8
    %813 = vset.pattern.permute.xlu0 %v812
    %814 = vperm.xlu0 %813, %v803
    %v815 = vpop.permute.xlu0 %814
    %v816 = vlaneseq
    %v817 = vshrl.u32 %v816, 7
    %v818 = vadd.s32 %v817, 16
    %819 = vset.pattern.permute.xlu0 %v818
    %820 = vperm.xlu0 %819, %v803
    %v821 = vpop.permute.xlu0 %820
    %v822 = vlaneseq
    %v823 = vshrl.u32 %v822, 7
    %v824 = vadd.s32 %v823, 24
    %825 = vset.pattern.permute.xlu0 %v824
    %826 = vperm.xlu0 %825, %v803
    %v827 = vpop.permute.xlu0 %826
    %v828 = vperm.slane %v312, 2
    %v829 = vlaneseq
    %v830 = vshrl.u32 %v829, 7
    %832 = vset.pattern.permute.xlu0 %v830
    %833 = vperm.xlu0 %832, %v828
    %v834 = vpop.permute.xlu0 %833
    %v835 = vlaneseq
    %v836 = vshrl.u32 %v835, 7
    %v837 = vadd.s32 %v836, 8
    %838 = vset.pattern.permute.xlu0 %v837
    %839 = vperm.xlu0 %838, %v828
    %v840 = vpop.permute.xlu0 %839
    %v841 = vlaneseq
    %v842 = vshrl.u32 %v841, 7
    %v843 = vadd.s32 %v842, 16
    %844 = vset.pattern.permute.xlu0 %v843
    %845 = vperm.xlu0 %844, %v828
    %v846 = vpop.permute.xlu0 %845
    %v847 = vlaneseq
    %v848 = vshrl.u32 %v847, 7
    %v849 = vadd.s32 %v848, 24
    %850 = vset.pattern.permute.xlu0 %v849
    %851 = vperm.xlu0 %850, %v828
    %v852 = vpop.permute.xlu0 %851
    %v853 = vperm.slane %v312, 3
    %v854 = vlaneseq
    %v855 = vshrl.u32 %v854, 7
    %857 = vset.pattern.permute.xlu0 %v855
    %858 = vperm.xlu0 %857, %v853
    %v859 = vpop.permute.xlu0 %858
    %v860 = vlaneseq
    %v861 = vshrl.u32 %v860, 7
    %v862 = vadd.s32 %v861, 8
    %863 = vset.pattern.permute.xlu0 %v862
    %864 = vperm.xlu0 %863, %v853
    %v865 = vpop.permute.xlu0 %864
    %v866 = vlaneseq
    %v867 = vshrl.u32 %v866, 7
    %v868 = vadd.s32 %v867, 16
    %869 = vset.pattern.permute.xlu0 %v868
    %870 = vperm.xlu0 %869, %v853
    %v871 = vpop.permute.xlu0 %870
    %v872 = vlaneseq
    %v873 = vshrl.u32 %v872, 7
    %v874 = vadd.s32 %v873, 24
    %875 = vset.pattern.permute.xlu0 %v874
    %876 = vperm.xlu0 %875, %v853
    %v877 = vpop.permute.xlu0 %876
    %v878 = vperm.slane %v312, 4
    %v879 = vlaneseq
    %v880 = vshrl.u32 %v879, 7
    %882 = vset.pattern.permute.xlu0 %v880
    %883 = vperm.xlu0 %882, %v878
    %v884 = vpop.permute.xlu0 %883
    %v885 = vlaneseq
    %v886 = vshrl.u32 %v885, 7
    %v887 = vadd.s32 %v886, 8
    %888 = vset.pattern.permute.xlu0 %v887
    %889 = vperm.xlu0 %888, %v878
    %v890 = vpop.permute.xlu0 %889
    %v891 = vlaneseq
    %v892 = vshrl.u32 %v891, 7
    %v893 = vadd.s32 %v892, 16
    %894 = vset.pattern.permute.xlu0 %v893
    %895 = vperm.xlu0 %894, %v878
    %v896 = vpop.permute.xlu0 %895
    %v897 = vlaneseq
    %v898 = vshrl.u32 %v897, 7
    %v899 = vadd.s32 %v898, 24
    %900 = vset.pattern.permute.xlu0 %v899
    %901 = vperm.xlu0 %900, %v878
    %v902 = vpop.permute.xlu0 %901
    %v903 = vperm.slane %v312, 5
    %v904 = vlaneseq
    %v905 = vshrl.u32 %v904, 7
    %907 = vset.pattern.permute.xlu0 %v905
    %908 = vperm.xlu0 %907, %v903
    %v909 = vpop.permute.xlu0 %908
    %v910 = vlaneseq
    %v911 = vshrl.u32 %v910, 7
    %v912 = vadd.s32 %v911, 8
    %913 = vset.pattern.permute.xlu0 %v912
    %914 = vperm.xlu0 %913, %v903
    %v915 = vpop.permute.xlu0 %914
    %v916 = vlaneseq
    %v917 = vshrl.u32 %v916, 7
    %v918 = vadd.s32 %v917, 16
    %919 = vset.pattern.permute.xlu0 %v918
    %920 = vperm.xlu0 %919, %v903
    %v921 = vpop.permute.xlu0 %920
    %v922 = vlaneseq
    %v923 = vshrl.u32 %v922, 7
    %v924 = vadd.s32 %v923, 24
    %925 = vset.pattern.permute.xlu0 %v924
    %926 = vperm.xlu0 %925, %v903
    %v927 = vpop.permute.xlu0 %926
    %v928 = vperm.slane %v312, 6
    %v929 = vlaneseq
    %v930 = vshrl.u32 %v929, 7
    %932 = vset.pattern.permute.xlu0 %v930
    %933 = vperm.xlu0 %932, %v928
    %v934 = vpop.permute.xlu0 %933
    %v935 = vlaneseq
    %v936 = vshrl.u32 %v935, 7
    %v937 = vadd.s32 %v936, 8
    %938 = vset.pattern.permute.xlu0 %v937
    %939 = vperm.xlu0 %938, %v928
    %v940 = vpop.permute.xlu0 %939
    %v941 = vlaneseq
    %v942 = vshrl.u32 %v941, 7
    %v943 = vadd.s32 %v942, 16
    %944 = vset.pattern.permute.xlu0 %v943
    %945 = vperm.xlu0 %944, %v928
    %v946 = vpop.permute.xlu0 %945
    %v947 = vlaneseq
    %v948 = vshrl.u32 %v947, 7
    %v949 = vadd.s32 %v948, 24
    %950 = vset.pattern.permute.xlu0 %v949
    %951 = vperm.xlu0 %950, %v928
    %v952 = vpop.permute.xlu0 %951
    %v953 = vperm.slane %v312, 7
    %v954 = vlaneseq
    %v955 = vshrl.u32 %v954, 7
    %957 = vset.pattern.permute.xlu0 %v955
    %958 = vperm.xlu0 %957, %v953
    %v959 = vpop.permute.xlu0 %958
    %v960 = vlaneseq
    %v961 = vshrl.u32 %v960, 7
    %v962 = vadd.s32 %v961, 8
    %963 = vset.pattern.permute.xlu0 %v962
    %964 = vperm.xlu0 %963, %v953
    %v965 = vpop.permute.xlu0 %964
    %v966 = vlaneseq
    %v967 = vshrl.u32 %v966, 7
    %v968 = vadd.s32 %v967, 16
    %969 = vset.pattern.permute.xlu0 %v968
    %970 = vperm.xlu0 %969, %v953
    %v971 = vpop.permute.xlu0 %970
    %v972 = vlaneseq
    %v973 = vshrl.u32 %v972, 7
    %v974 = vadd.s32 %v973, 24
    %975 = vset.pattern.permute.xlu0 %v974
    %976 = vperm.xlu0 %975, %v953
    %v977 = vpop.permute.xlu0 %976
    %v978 = vperm.slane %v313, 0
    %v979 = vlaneseq
    %v980 = vshrl.u32 %v979, 7
    %982 = vset.pattern.permute.xlu0 %v980
    %983 = vperm.xlu0 %982, %v978
    %v984 = vpop.permute.xlu0 %983
    %v985 = vlaneseq
    %v986 = vshrl.u32 %v985, 7
    %v987 = vadd.s32 %v986, 8
    %988 = vset.pattern.permute.xlu0 %v987
    %989 = vperm.xlu0 %988, %v978
    %v990 = vpop.permute.xlu0 %989
    %v991 = vlaneseq
    %v992 = vshrl.u32 %v991, 7
    %v993 = vadd.s32 %v992, 16
    %994 = vset.pattern.permute.xlu0 %v993
    %995 = vperm.xlu0 %994, %v978
    %v996 = vpop.permute.xlu0 %995
    %v997 = vlaneseq
    %v998 = vshrl.u32 %v997, 7
    %v999 = vadd.s32 %v998, 24
    %1000 = vset.pattern.permute.xlu0 %v999
    %1001 = vperm.xlu0 %1000, %v978
    %v1002 = vpop.permute.xlu0 %1001
    %v1003 = vperm.slane %v313, 1
    %v1004 = vlaneseq
    %v1005 = vshrl.u32 %v1004, 7
    %1007 = vset.pattern.permute.xlu0 %v1005
    %1008 = vperm.xlu0 %1007, %v1003
    %v1009 = vpop.permute.xlu0 %1008
    %v1010 = vlaneseq
    %v1011 = vshrl.u32 %v1010, 7
    %v1012 = vadd.s32 %v1011, 8
    %1013 = vset.pattern.permute.xlu0 %v1012
    %1014 = vperm.xlu0 %1013, %v1003
    %v1015 = vpop.permute.xlu0 %1014
    %v1016 = vlaneseq
    %v1017 = vshrl.u32 %v1016, 7
    %v1018 = vadd.s32 %v1017, 16
    %1019 = vset.pattern.permute.xlu0 %v1018
    %1020 = vperm.xlu0 %1019, %v1003
    %v1021 = vpop.permute.xlu0 %1020
    %v1022 = vlaneseq
    %v1023 = vshrl.u32 %v1022, 7
    %v1024 = vadd.s32 %v1023, 24
    %1025 = vset.pattern.permute.xlu0 %v1024
    %1026 = vperm.xlu0 %1025, %v1003
    %v1027 = vpop.permute.xlu0 %1026
    %v1028 = vperm.slane %v313, 2
    %v1029 = vlaneseq
    %v1030 = vshrl.u32 %v1029, 7
    %1032 = vset.pattern.permute.xlu0 %v1030
    %1033 = vperm.xlu0 %1032, %v1028
    %v1034 = vpop.permute.xlu0 %1033
    %v1035 = vlaneseq
    %v1036 = vshrl.u32 %v1035, 7
    %v1037 = vadd.s32 %v1036, 8
    %1038 = vset.pattern.permute.xlu0 %v1037
    %1039 = vperm.xlu0 %1038, %v1028
    %v1040 = vpop.permute.xlu0 %1039
    %v1041 = vlaneseq
    %v1042 = vshrl.u32 %v1041, 7
    %v1043 = vadd.s32 %v1042, 16
    %1044 = vset.pattern.permute.xlu0 %v1043
    %1045 = vperm.xlu0 %1044, %v1028
    %v1046 = vpop.permute.xlu0 %1045
    %v1047 = vlaneseq
    %v1048 = vshrl.u32 %v1047, 7
    %v1049 = vadd.s32 %v1048, 24
    %1050 = vset.pattern.permute.xlu0 %v1049
    %1051 = vperm.xlu0 %1050, %v1028
    %v1052 = vpop.permute.xlu0 %1051
    %v1053 = vperm.slane %v313, 3
    %v1054 = vlaneseq
    %v1055 = vshrl.u32 %v1054, 7
    %1057 = vset.pattern.permute.xlu0 %v1055
    %1058 = vperm.xlu0 %1057, %v1053
    %v1059 = vpop.permute.xlu0 %1058
    %v1060 = vlaneseq
    %v1061 = vshrl.u32 %v1060, 7
    %v1062 = vadd.s32 %v1061, 8
    %1063 = vset.pattern.permute.xlu0 %v1062
    %1064 = vperm.xlu0 %1063, %v1053
    %v1065 = vpop.permute.xlu0 %1064
    %v1066 = vlaneseq
    %v1067 = vshrl.u32 %v1066, 7
    %v1068 = vadd.s32 %v1067, 16
    %1069 = vset.pattern.permute.xlu0 %v1068
    %1070 = vperm.xlu0 %1069, %v1053
    %v1071 = vpop.permute.xlu0 %1070
    %v1072 = vlaneseq
    %v1073 = vshrl.u32 %v1072, 7
    %v1074 = vadd.s32 %v1073, 24
    %1075 = vset.pattern.permute.xlu0 %v1074
    %1076 = vperm.xlu0 %1075, %v1053
    %v1077 = vpop.permute.xlu0 %1076
    %v1078 = vperm.slane %v313, 4
    %v1079 = vlaneseq
    %v1080 = vshrl.u32 %v1079, 7
    %1082 = vset.pattern.permute.xlu0 %v1080
    %1083 = vperm.xlu0 %1082, %v1078
    %v1084 = vpop.permute.xlu0 %1083
    %v1085 = vlaneseq
    %v1086 = vshrl.u32 %v1085, 7
    %v1087 = vadd.s32 %v1086, 8
    %1088 = vset.pattern.permute.xlu0 %v1087
    %1089 = vperm.xlu0 %1088, %v1078
    %v1090 = vpop.permute.xlu0 %1089
    %v1091 = vlaneseq
    %v1092 = vshrl.u32 %v1091, 7
    %v1093 = vadd.s32 %v1092, 16
    %1094 = vset.pattern.permute.xlu0 %v1093
    %1095 = vperm.xlu0 %1094, %v1078
    %v1096 = vpop.permute.xlu0 %1095
    %v1097 = vlaneseq
    %v1098 = vshrl.u32 %v1097, 7
    %v1099 = vadd.s32 %v1098, 24
    %1100 = vset.pattern.permute.xlu0 %v1099
    %1101 = vperm.xlu0 %1100, %v1078
    %v1102 = vpop.permute.xlu0 %1101
    %v1103 = vperm.slane %v313, 5
    %v1104 = vlaneseq
    %v1105 = vshrl.u32 %v1104, 7
    %1107 = vset.pattern.permute.xlu0 %v1105
    %1108 = vperm.xlu0 %1107, %v1103
    %v1109 = vpop.permute.xlu0 %1108
    %v1110 = vlaneseq
    %v1111 = vshrl.u32 %v1110, 7
    %v1112 = vadd.s32 %v1111, 8
    %1113 = vset.pattern.permute.xlu0 %v1112
    %1114 = vperm.xlu0 %1113, %v1103
    %v1115 = vpop.permute.xlu0 %1114
    %v1116 = vlaneseq
    %v1117 = vshrl.u32 %v1116, 7
    %v1118 = vadd.s32 %v1117, 16
    %1119 = vset.pattern.permute.xlu0 %v1118
    %1120 = vperm.xlu0 %1119, %v1103
    %v1121 = vpop.permute.xlu0 %1120
    %v1122 = vlaneseq
    %v1123 = vshrl.u32 %v1122, 7
    %v1124 = vadd.s32 %v1123, 24
    %1125 = vset.pattern.permute.xlu0 %v1124
    %1126 = vperm.xlu0 %1125, %v1103
    %v1127 = vpop.permute.xlu0 %1126
    %v1128 = vperm.slane %v313, 6
    %v1129 = vlaneseq
    %v1130 = vshrl.u32 %v1129, 7
    %1132 = vset.pattern.permute.xlu0 %v1130
    %1133 = vperm.xlu0 %1132, %v1128
    %v1134 = vpop.permute.xlu0 %1133
    %v1135 = vlaneseq
    %v1136 = vshrl.u32 %v1135, 7
    %v1137 = vadd.s32 %v1136, 8
    %1138 = vset.pattern.permute.xlu0 %v1137
    %1139 = vperm.xlu0 %1138, %v1128
    %v1140 = vpop.permute.xlu0 %1139
    %v1141 = vlaneseq
    %v1142 = vshrl.u32 %v1141, 7
    %v1143 = vadd.s32 %v1142, 16
    %1144 = vset.pattern.permute.xlu0 %v1143
    %1145 = vperm.xlu0 %1144, %v1128
    %v1146 = vpop.permute.xlu0 %1145
    %v1147 = vlaneseq
    %v1148 = vshrl.u32 %v1147, 7
    %v1149 = vadd.s32 %v1148, 24
    %1150 = vset.pattern.permute.xlu0 %v1149
    %1151 = vperm.xlu0 %1150, %v1128
    %v1152 = vpop.permute.xlu0 %1151
    %v1153 = vperm.slane %v313, 7
    %v1154 = vlaneseq
    %v1155 = vshrl.u32 %v1154, 7
    %1157 = vset.pattern.permute.xlu0 %v1155
    %1158 = vperm.xlu0 %1157, %v1153
    %v1159 = vpop.permute.xlu0 %1158
    %v1160 = vlaneseq
    %v1161 = vshrl.u32 %v1160, 7
    %v1162 = vadd.s32 %v1161, 8
    %1163 = vset.pattern.permute.xlu0 %v1162
    %1164 = vperm.xlu0 %1163, %v1153
    %v1165 = vpop.permute.xlu0 %1164
    %v1166 = vlaneseq
    %v1167 = vshrl.u32 %v1166, 7
    %v1168 = vadd.s32 %v1167, 16
    %1169 = vset.pattern.permute.xlu0 %v1168
    %1170 = vperm.xlu0 %1169, %v1153
    %v1171 = vpop.permute.xlu0 %1170
    %v1172 = vlaneseq
    %v1173 = vshrl.u32 %v1172, 7
    %v1174 = vadd.s32 %v1173, 24
    %1175 = vset.pattern.permute.xlu0 %v1174
    %1176 = vperm.xlu0 %1175, %v1153
    %v1177 = vpop.permute.xlu0 %1176
    %v1178 = vrot.slane %v137, 1
    %v1179 = vrot.slane %v137, 2
    %v1180 = vrot.slane %v137, 3
    %v1181 = vrot.slane %v137, 4
    %v1182 = vrot.slane %v137, 5
    %v1183 = vrot.slane %v137, 6
    %v1184 = vrot.slane %v137, 7
    %v1185 = vrot.slane %v140, 1
    %v1186 = vrot.slane %v140, 2
    %v1187 = vrot.slane %v140, 3
    %v1188 = vrot.slane %v140, 4
    %v1189 = vrot.slane %v140, 5
    %v1190 = vrot.slane %v140, 6
    %v1191 = vrot.slane %v140, 7
    %v1192 = vperm.slane %v137, 0
    %v1193 = vperm.slane %v1178, 0
    %v1194 = vperm.slane %v1179, 0
    %v1195 = vperm.slane %v1180, 0
    %v1196 = vperm.slane %v1181, 0
    %v1197 = vperm.slane %v1182, 0
    %v1198 = vperm.slane %v1183, 0
    %v1199 = vperm.slane %v1184, 0
    %v1200 = vperm.slane %v140, 0
    %v1201 = vperm.slane %v1185, 0
    %v1202 = vperm.slane %v1186, 0
    %v1203 = vperm.slane %v1187, 0
    %v1204 = vperm.slane %v1188, 0
    %v1205 = vperm.slane %v1189, 0
    %v1206 = vperm.slane %v1190, 0
    %v1207 = vperm.slane %v1191, 0
    %v1224 = vmul.f32 %v784, %v1192
    %v1225 = vmul.f32 %v790, %v1192
    %v1226 = vmul.f32 %v796, %v1192
    %v1227 = vmul.f32 %v802, %v1192
    %v1228 = vmul.f32 %v809, %v1193
    %v1229 = vmul.f32 %v815, %v1193
    %v1230 = vmul.f32 %v821, %v1193
    %v1231 = vmul.f32 %v827, %v1193
    %v1232 = vmul.f32 %v834, %v1194
    %v1233 = vmul.f32 %v840, %v1194
    %v1234 = vmul.f32 %v846, %v1194
    %v1235 = vmul.f32 %v852, %v1194
    %v1236 = vmul.f32 %v859, %v1195
    %v1237 = vmul.f32 %v865, %v1195
    %v1238 = vmul.f32 %v871, %v1195
    %v1239 = vmul.f32 %v877, %v1195
    %v1240 = vmul.f32 %v884, %v1196
    %v1241 = vmul.f32 %v890, %v1196
    %v1242 = vmul.f32 %v896, %v1196
    %v1243 = vmul.f32 %v902, %v1196
    %v1244 = vmul.f32 %v909, %v1197
    %v1245 = vmul.f32 %v915, %v1197
    %v1246 = vmul.f32 %v921, %v1197
    %v1247 = vmul.f32 %v927, %v1197
    %v1248 = vmul.f32 %v934, %v1198
    %v1249 = vmul.f32 %v940, %v1198
    %v1250 = vmul.f32 %v946, %v1198
    %v1251 = vmul.f32 %v952, %v1198
    %v1252 = vmul.f32 %v959, %v1199
    %v1253 = vmul.f32 %v965, %v1199
    %v1254 = vmul.f32 %v971, %v1199
    %v1255 = vmul.f32 %v977, %v1199
    %v1256 = vmul.f32 %v984, %v1200
    %v1257 = vmul.f32 %v990, %v1200
    %v1258 = vmul.f32 %v996, %v1200
    %v1259 = vmul.f32 %v1002, %v1200
    %v1260 = vmul.f32 %v1009, %v1201
    %v1261 = vmul.f32 %v1015, %v1201
    %v1262 = vmul.f32 %v1021, %v1201
    %v1263 = vmul.f32 %v1027, %v1201
    %v1264 = vmul.f32 %v1034, %v1202
    %v1265 = vmul.f32 %v1040, %v1202
    %v1266 = vmul.f32 %v1046, %v1202
    %v1267 = vmul.f32 %v1052, %v1202
    %v1268 = vmul.f32 %v1059, %v1203
    %v1269 = vmul.f32 %v1065, %v1203
    %v1270 = vmul.f32 %v1071, %v1203
    %v1271 = vmul.f32 %v1077, %v1203
    %v1272 = vmul.f32 %v1084, %v1204
    %v1273 = vmul.f32 %v1090, %v1204
    %v1274 = vmul.f32 %v1096, %v1204
    %v1275 = vmul.f32 %v1102, %v1204
    %v1276 = vmul.f32 %v1109, %v1205
    %v1277 = vmul.f32 %v1115, %v1205
    %v1278 = vmul.f32 %v1121, %v1205
    %v1279 = vmul.f32 %v1127, %v1205
    %v1280 = vmul.f32 %v1134, %v1206
    %v1281 = vmul.f32 %v1140, %v1206
    %v1282 = vmul.f32 %v1146, %v1206
    %v1283 = vmul.f32 %v1152, %v1206
    %v1284 = vmul.f32 %v1159, %v1207
    %v1285 = vmul.f32 %v1165, %v1207
    %v1286 = vmul.f32 %v1171, %v1207
    %v1287 = vmul.f32 %v1177, %v1207
    %v1288 = vadd.f32 %v714, %v1224
    %v1289 = vadd.f32 %v715, %v1225
    %v1290 = vadd.f32 %v716, %v1226
    %v1291 = vadd.f32 %v717, %v1227
    %v1292 = vadd.f32 %v718, %v1228
    %v1293 = vadd.f32 %v719, %v1229
    %v1294 = vadd.f32 %v720, %v1230
    %v1295 = vadd.f32 %v721, %v1231
    %v1296 = vadd.f32 %v722, %v1232
    %v1297 = vadd.f32 %v723, %v1233
    %v1298 = vadd.f32 %v724, %v1234
    %v1299 = vadd.f32 %v725, %v1235
    %v1300 = vadd.f32 %v726, %v1236
    %v1301 = vadd.f32 %v727, %v1237
    %v1302 = vadd.f32 %v728, %v1238
    %v1303 = vadd.f32 %v729, %v1239
    %v1304 = vadd.f32 %v730, %v1240
    %v1305 = vadd.f32 %v731, %v1241
    %v1306 = vadd.f32 %v732, %v1242
    %v1307 = vadd.f32 %v733, %v1243
    %v1308 = vadd.f32 %v734, %v1244
    %v1309 = vadd.f32 %v735, %v1245
    %v1310 = vadd.f32 %v736, %v1246
    %v1311 = vadd.f32 %v737, %v1247
    %v1312 = vadd.f32 %v738, %v1248
    %v1313 = vadd.f32 %v739, %v1249
    %v1314 = vadd.f32 %v740, %v1250
    %v1315 = vadd.f32 %v741, %v1251
    %v1316 = vadd.f32 %v742, %v1252
    %v1317 = vadd.f32 %v743, %v1253
    %v1318 = vadd.f32 %v744, %v1254
    %v1319 = vadd.f32 %v745, %v1255
    %v1320 = vadd.f32 %v746, %v1256
    %v1321 = vadd.f32 %v747, %v1257
    %v1322 = vadd.f32 %v748, %v1258
    %v1323 = vadd.f32 %v749, %v1259
    %v1324 = vadd.f32 %v750, %v1260
    %v1325 = vadd.f32 %v751, %v1261
    %v1326 = vadd.f32 %v752, %v1262
    %v1327 = vadd.f32 %v753, %v1263
    %v1328 = vadd.f32 %v754, %v1264
    %v1329 = vadd.f32 %v755, %v1265
    %v1330 = vadd.f32 %v756, %v1266
    %v1331 = vadd.f32 %v757, %v1267
    %v1332 = vadd.f32 %v758, %v1268
    %v1333 = vadd.f32 %v759, %v1269
    %v1334 = vadd.f32 %v760, %v1270
    %v1335 = vadd.f32 %v761, %v1271
    %v1336 = vadd.f32 %v762, %v1272
    %v1337 = vadd.f32 %v763, %v1273
    %v1338 = vadd.f32 %v764, %v1274
    %v1339 = vadd.f32 %v765, %v1275
    %v1340 = vadd.f32 %v766, %v1276
    %v1341 = vadd.f32 %v767, %v1277
    %v1342 = vadd.f32 %v768, %v1278
    %v1343 = vadd.f32 %v769, %v1279
    %v1344 = vadd.f32 %v770, %v1280
    %v1345 = vadd.f32 %v771, %v1281
    %v1346 = vadd.f32 %v772, %v1282
    %v1347 = vadd.f32 %v773, %v1283
    %v1348 = vadd.f32 %v774, %v1284
    %v1349 = vadd.f32 %v775, %v1285
    %v1350 = vadd.f32 %v776, %v1286
    %v1351 = vadd.f32 %v777, %v1287
    %1354 = vrot.lane.b32.xlu0 %v206, 32
    %v1355 = vpop.permute.xlu0 %1354
    %1356 = vrot.lane.b32.xlu0 %v207, 32
    %v1357 = vpop.permute.xlu0 %1356
    %v1360 = vmul.f32 %v229, %v1355
    %v1361 = vmul.f32 %v231, %v1357
    %v1362 = vmul.f32 %v301, %v137
    %v1363 = vmul.f32 %v303, %v140
    %1366 = vrot.lane.b32.xlu0 %v1362, 32
    %v1367 = vpop.permute.xlu0 %1366
    %1368 = vrot.lane.b32.xlu0 %v1363, 32
    %v1369 = vpop.permute.xlu0 %1368
    %v1372 = vadd.f32 %v1360, %v1367
    %v1373 = vadd.f32 %v1361, %v1369
    %1374 = vrot.lane.b32.xlu0 %v114, 64
    %v1375 = vpop.permute.xlu0 %1374
    %1376 = vrot.lane.b32.xlu0 %v117, 64
    %v1377 = vpop.permute.xlu0 %1376
    %v1380 = vmul.f32 %v1372, %v1375
    %v1381 = vmul.f32 %v1373, %v1377
    %1384 = vrot.lane.b32.xlu0 %v1380, 96
    %v1385 = vpop.permute.xlu0 %1384
    %1386 = vrot.lane.b32.xlu0 %v1381, 96
    %v1387 = vpop.permute.xlu0 %1386
    %vm1390 = vcmask 261120
    %v1391 = vsel %vm1390, %v1385, 0.0
    %1392 = vadd.xlane.f32.xlu0 %v1391
    %v1393 = vpop.xlane.xlu0 %1392
    %v1394 = vsel %vm1390, %v1387, 0.0
    %1395 = vadd.xlane.f32.xlu0 %v1394
    %v1396 = vpop.xlane.xlu0 %1395
    %v1397 = vand.u32 2147483647, %v1393
    %v1398 = vand.u32 2147483647, %v1396
    %v1399 = vmax.f32 %v1397, 1.0
    %v1400 = vmax.f32 %v1398, 1.0
    %v1401 = vrot.slane %v114, 1
    %v1402 = vrot.slane %v114, 2
    %v1403 = vrot.slane %v114, 3
    %v1404 = vrot.slane %v114, 4
    %v1405 = vrot.slane %v114, 5
    %v1406 = vrot.slane %v114, 6
    %v1407 = vrot.slane %v114, 7
    %v1408 = vrot.slane %v117, 1
    %v1409 = vrot.slane %v117, 2
    %v1410 = vrot.slane %v117, 3
    %v1411 = vrot.slane %v117, 4
    %v1412 = vrot.slane %v117, 5
    %v1413 = vrot.slane %v117, 6
    %v1414 = vrot.slane %v117, 7
    %v1415 = vperm.slane %v114, 0
    %v1416 = vperm.slane %v1401, 0
    %v1417 = vperm.slane %v1402, 0
    %v1418 = vperm.slane %v1403, 0
    %v1419 = vperm.slane %v1404, 0
    %v1420 = vperm.slane %v1405, 0
    %v1421 = vperm.slane %v1406, 0
    %v1422 = vperm.slane %v1407, 0
    %v1423 = vperm.slane %v117, 0
    %v1424 = vperm.slane %v1408, 0
    %v1425 = vperm.slane %v1409, 0
    %v1426 = vperm.slane %v1410, 0
    %v1427 = vperm.slane %v1411, 0
    %v1428 = vperm.slane %v1412, 0
    %v1429 = vperm.slane %v1413, 0
    %v1430 = vperm.slane %v1414, 0
    %1431 = vrot.lane.b32.xlu0 %v1415, 32
    %v1432 = vpop.permute.xlu0 %1431
    %1433 = vrot.lane.b32.xlu0 %v1416, 32
    %v1434 = vpop.permute.xlu0 %1433
    %1435 = vrot.lane.b32.xlu0 %v1417, 32
    %v1436 = vpop.permute.xlu0 %1435
    %1437 = vrot.lane.b32.xlu0 %v1418, 32
    %v1438 = vpop.permute.xlu0 %1437
    %1439 = vrot.lane.b32.xlu0 %v1419, 32
    %v1440 = vpop.permute.xlu0 %1439
    %1441 = vrot.lane.b32.xlu0 %v1420, 32
    %v1442 = vpop.permute.xlu0 %1441
    %1443 = vrot.lane.b32.xlu0 %v1421, 32
    %v1444 = vpop.permute.xlu0 %1443
    %1445 = vrot.lane.b32.xlu0 %v1422, 32
    %v1446 = vpop.permute.xlu0 %1445
    %1447 = vrot.lane.b32.xlu0 %v1423, 32
    %v1448 = vpop.permute.xlu0 %1447
    %1449 = vrot.lane.b32.xlu0 %v1424, 32
    %v1450 = vpop.permute.xlu0 %1449
    %1451 = vrot.lane.b32.xlu0 %v1425, 32
    %v1452 = vpop.permute.xlu0 %1451
    %1453 = vrot.lane.b32.xlu0 %v1426, 32
    %v1454 = vpop.permute.xlu0 %1453
    %1455 = vrot.lane.b32.xlu0 %v1427, 32
    %v1456 = vpop.permute.xlu0 %1455
    %1457 = vrot.lane.b32.xlu0 %v1428, 32
    %v1458 = vpop.permute.xlu0 %1457
    %1459 = vrot.lane.b32.xlu0 %v1429, 32
    %v1460 = vpop.permute.xlu0 %1459
    %1461 = vrot.lane.b32.xlu0 %v1430, 32
    %v1462 = vpop.permute.xlu0 %1461
    %v1479 = vmul.f32 %v1288, %v1432
    %v1480 = vmul.f32 %v1289, %v1432
    %v1481 = vmul.f32 %v1290, %v1432
    %v1482 = vmul.f32 %v1291, %v1432
    %v1483 = vmul.f32 %v1292, %v1434
    %v1484 = vmul.f32 %v1293, %v1434
    %v1485 = vmul.f32 %v1294, %v1434
    %v1486 = vmul.f32 %v1295, %v1434
    %v1487 = vmul.f32 %v1296, %v1436
    %v1488 = vmul.f32 %v1297, %v1436
    %v1489 = vmul.f32 %v1298, %v1436
    %v1490 = vmul.f32 %v1299, %v1436
    %v1491 = vmul.f32 %v1300, %v1438
    %v1492 = vmul.f32 %v1301, %v1438
    %v1493 = vmul.f32 %v1302, %v1438
    %v1494 = vmul.f32 %v1303, %v1438
    %v1495 = vmul.f32 %v1304, %v1440
    %v1496 = vmul.f32 %v1305, %v1440
    %v1497 = vmul.f32 %v1306, %v1440
    %v1498 = vmul.f32 %v1307, %v1440
    %v1499 = vmul.f32 %v1308, %v1442
    %v1500 = vmul.f32 %v1309, %v1442
    %v1501 = vmul.f32 %v1310, %v1442
    %v1502 = vmul.f32 %v1311, %v1442
    %v1503 = vmul.f32 %v1312, %v1444
    %v1504 = vmul.f32 %v1313, %v1444
    %v1505 = vmul.f32 %v1314, %v1444
    %v1506 = vmul.f32 %v1315, %v1444
    %v1507 = vmul.f32 %v1316, %v1446
    %v1508 = vmul.f32 %v1317, %v1446
    %v1509 = vmul.f32 %v1318, %v1446
    %v1510 = vmul.f32 %v1319, %v1446
    %v1511 = vmul.f32 %v1320, %v1448
    %v1512 = vmul.f32 %v1321, %v1448
    %v1513 = vmul.f32 %v1322, %v1448
    %v1514 = vmul.f32 %v1323, %v1448
    %v1515 = vmul.f32 %v1324, %v1450
    %v1516 = vmul.f32 %v1325, %v1450
    %v1517 = vmul.f32 %v1326, %v1450
    %v1518 = vmul.f32 %v1327, %v1450
    %v1519 = vmul.f32 %v1328, %v1452
    %v1520 = vmul.f32 %v1329, %v1452
    %v1521 = vmul.f32 %v1330, %v1452
    %v1522 = vmul.f32 %v1331, %v1452
    %v1523 = vmul.f32 %v1332, %v1454
    %v1524 = vmul.f32 %v1333, %v1454
    %v1525 = vmul.f32 %v1334, %v1454
    %v1526 = vmul.f32 %v1335, %v1454
    %v1527 = vmul.f32 %v1336, %v1456
    %v1528 = vmul.f32 %v1337, %v1456
    %v1529 = vmul.f32 %v1338, %v1456
    %v1530 = vmul.f32 %v1339, %v1456
    %v1531 = vmul.f32 %v1340, %v1458
    %v1532 = vmul.f32 %v1341, %v1458
    %v1533 = vmul.f32 %v1342, %v1458
    %v1534 = vmul.f32 %v1343, %v1458
    %v1535 = vmul.f32 %v1344, %v1460
    %v1536 = vmul.f32 %v1345, %v1460
    %v1537 = vmul.f32 %v1346, %v1460
    %v1538 = vmul.f32 %v1347, %v1460
    %v1539 = vmul.f32 %v1348, %v1462
    %v1540 = vmul.f32 %v1349, %v1462
    %v1541 = vmul.f32 %v1350, %v1462
    %v1542 = vmul.f32 %v1351, %v1462
    %v1543 = vsel %vm1390, %v1479, 0.0
    %1544 = vadd.xlane.f32.xlu0 %v1543
    %v1545 = vpop.xlane.xlu0 %1544
    %v1546 = vsel %vm1390, %v1480, 0.0
    %1547 = vadd.xlane.f32.xlu0 %v1546
    %v1548 = vpop.xlane.xlu0 %1547
    %v1549 = vsel %vm1390, %v1481, 0.0
    %1550 = vadd.xlane.f32.xlu0 %v1549
    %v1551 = vpop.xlane.xlu0 %1550
    %v1552 = vsel %vm1390, %v1482, 0.0
    %1553 = vadd.xlane.f32.xlu0 %v1552
    %v1554 = vpop.xlane.xlu0 %1553
    %v1555 = vsel %vm1390, %v1483, 0.0
    %1556 = vadd.xlane.f32.xlu0 %v1555
    %v1557 = vpop.xlane.xlu0 %1556
    %v1558 = vsel %vm1390, %v1484, 0.0
    %1559 = vadd.xlane.f32.xlu0 %v1558
    %v1560 = vpop.xlane.xlu0 %1559
    %v1561 = vsel %vm1390, %v1485, 0.0
    %1562 = vadd.xlane.f32.xlu0 %v1561
    %v1563 = vpop.xlane.xlu0 %1562
    %v1564 = vsel %vm1390, %v1486, 0.0
    %1565 = vadd.xlane.f32.xlu0 %v1564
    %v1566 = vpop.xlane.xlu0 %1565
    %v1567 = vsel %vm1390, %v1487, 0.0
    %1568 = vadd.xlane.f32.xlu0 %v1567
    %v1569 = vpop.xlane.xlu0 %1568
    %v1570 = vsel %vm1390, %v1488, 0.0
    %1571 = vadd.xlane.f32.xlu0 %v1570
    %v1572 = vpop.xlane.xlu0 %1571
    %v1573 = vsel %vm1390, %v1489, 0.0
    %1574 = vadd.xlane.f32.xlu0 %v1573
    %v1575 = vpop.xlane.xlu0 %1574
    %v1576 = vsel %vm1390, %v1490, 0.0
    %1577 = vadd.xlane.f32.xlu0 %v1576
    %v1578 = vpop.xlane.xlu0 %1577
    %v1579 = vsel %vm1390, %v1491, 0.0
    %1580 = vadd.xlane.f32.xlu0 %v1579
    %v1581 = vpop.xlane.xlu0 %1580
    %v1582 = vsel %vm1390, %v1492, 0.0
    %1583 = vadd.xlane.f32.xlu0 %v1582
    %v1584 = vpop.xlane.xlu0 %1583
    %v1585 = vsel %vm1390, %v1493, 0.0
    %1586 = vadd.xlane.f32.xlu0 %v1585
    %v1587 = vpop.xlane.xlu0 %1586
    %v1588 = vsel %vm1390, %v1494, 0.0
    %1589 = vadd.xlane.f32.xlu0 %v1588
    %v1590 = vpop.xlane.xlu0 %1589
    %v1591 = vsel %vm1390, %v1495, 0.0
    %1592 = vadd.xlane.f32.xlu0 %v1591
    %v1593 = vpop.xlane.xlu0 %1592
    %v1594 = vsel %vm1390, %v1496, 0.0
    %1595 = vadd.xlane.f32.xlu0 %v1594
    %v1596 = vpop.xlane.xlu0 %1595
    %v1597 = vsel %vm1390, %v1497, 0.0
    %1598 = vadd.xlane.f32.xlu0 %v1597
    %v1599 = vpop.xlane.xlu0 %1598
    %v1600 = vsel %vm1390, %v1498, 0.0
    %1601 = vadd.xlane.f32.xlu0 %v1600
    %v1602 = vpop.xlane.xlu0 %1601
    %v1603 = vsel %vm1390, %v1499, 0.0
    %1604 = vadd.xlane.f32.xlu0 %v1603
    %v1605 = vpop.xlane.xlu0 %1604
    %v1606 = vsel %vm1390, %v1500, 0.0
    %1607 = vadd.xlane.f32.xlu0 %v1606
    %v1608 = vpop.xlane.xlu0 %1607
    %v1609 = vsel %vm1390, %v1501, 0.0
    %1610 = vadd.xlane.f32.xlu0 %v1609
    %v1611 = vpop.xlane.xlu0 %1610
    %v1612 = vsel %vm1390, %v1502, 0.0
    %1613 = vadd.xlane.f32.xlu0 %v1612
    %v1614 = vpop.xlane.xlu0 %1613
    %v1615 = vsel %vm1390, %v1503, 0.0
    %1616 = vadd.xlane.f32.xlu0 %v1615
    %v1617 = vpop.xlane.xlu0 %1616
    %v1618 = vsel %vm1390, %v1504, 0.0
    %1619 = vadd.xlane.f32.xlu0 %v1618
    %v1620 = vpop.xlane.xlu0 %1619
    %v1621 = vsel %vm1390, %v1505, 0.0
    %1622 = vadd.xlane.f32.xlu0 %v1621
    %v1623 = vpop.xlane.xlu0 %1622
    %v1624 = vsel %vm1390, %v1506, 0.0
    %1625 = vadd.xlane.f32.xlu0 %v1624
    %v1626 = vpop.xlane.xlu0 %1625
    %v1627 = vsel %vm1390, %v1507, 0.0
    %1628 = vadd.xlane.f32.xlu0 %v1627
    %v1629 = vpop.xlane.xlu0 %1628
    %v1630 = vsel %vm1390, %v1508, 0.0
    %1631 = vadd.xlane.f32.xlu0 %v1630
    %v1632 = vpop.xlane.xlu0 %1631
    %v1633 = vsel %vm1390, %v1509, 0.0
    %1634 = vadd.xlane.f32.xlu0 %v1633
    %v1635 = vpop.xlane.xlu0 %1634
    %v1636 = vsel %vm1390, %v1510, 0.0
    %1637 = vadd.xlane.f32.xlu0 %v1636
    %v1638 = vpop.xlane.xlu0 %1637
    %v1639 = vsel %vm1390, %v1511, 0.0
    %1640 = vadd.xlane.f32.xlu0 %v1639
    %v1641 = vpop.xlane.xlu0 %1640
    %v1642 = vsel %vm1390, %v1512, 0.0
    %1643 = vadd.xlane.f32.xlu0 %v1642
    %v1644 = vpop.xlane.xlu0 %1643
    %v1645 = vsel %vm1390, %v1513, 0.0
    %1646 = vadd.xlane.f32.xlu0 %v1645
    %v1647 = vpop.xlane.xlu0 %1646
    %v1648 = vsel %vm1390, %v1514, 0.0
    %1649 = vadd.xlane.f32.xlu0 %v1648
    %v1650 = vpop.xlane.xlu0 %1649
    %v1651 = vsel %vm1390, %v1515, 0.0
    %1652 = vadd.xlane.f32.xlu0 %v1651
    %v1653 = vpop.xlane.xlu0 %1652
    %v1654 = vsel %vm1390, %v1516, 0.0
    %1655 = vadd.xlane.f32.xlu0 %v1654
    %v1656 = vpop.xlane.xlu0 %1655
    %v1657 = vsel %vm1390, %v1517, 0.0
    %1658 = vadd.xlane.f32.xlu0 %v1657
    %v1659 = vpop.xlane.xlu0 %1658
    %v1660 = vsel %vm1390, %v1518, 0.0
    %1661 = vadd.xlane.f32.xlu0 %v1660
    %v1662 = vpop.xlane.xlu0 %1661
    %v1663 = vsel %vm1390, %v1519, 0.0
    %1664 = vadd.xlane.f32.xlu0 %v1663
    %v1665 = vpop.xlane.xlu0 %1664
    %v1666 = vsel %vm1390, %v1520, 0.0
    %1667 = vadd.xlane.f32.xlu0 %v1666
    %v1668 = vpop.xlane.xlu0 %1667
    %v1669 = vsel %vm1390, %v1521, 0.0
    %1670 = vadd.xlane.f32.xlu0 %v1669
    %v1671 = vpop.xlane.xlu0 %1670
    %v1672 = vsel %vm1390, %v1522, 0.0
    %1673 = vadd.xlane.f32.xlu0 %v1672
    %v1674 = vpop.xlane.xlu0 %1673
    %v1675 = vsel %vm1390, %v1523, 0.0
    %1676 = vadd.xlane.f32.xlu0 %v1675
    %v1677 = vpop.xlane.xlu0 %1676
    %v1678 = vsel %vm1390, %v1524, 0.0
    %1679 = vadd.xlane.f32.xlu0 %v1678
    %v1680 = vpop.xlane.xlu0 %1679
    %v1681 = vsel %vm1390, %v1525, 0.0
    %1682 = vadd.xlane.f32.xlu0 %v1681
    %v1683 = vpop.xlane.xlu0 %1682
    %v1684 = vsel %vm1390, %v1526, 0.0
    %1685 = vadd.xlane.f32.xlu0 %v1684
    %v1686 = vpop.xlane.xlu0 %1685
    %v1687 = vsel %vm1390, %v1527, 0.0
    %1688 = vadd.xlane.f32.xlu0 %v1687
    %v1689 = vpop.xlane.xlu0 %1688
    %v1690 = vsel %vm1390, %v1528, 0.0
    %1691 = vadd.xlane.f32.xlu0 %v1690
    %v1692 = vpop.xlane.xlu0 %1691
    %v1693 = vsel %vm1390, %v1529, 0.0
    %1694 = vadd.xlane.f32.xlu0 %v1693
    %v1695 = vpop.xlane.xlu0 %1694
    %v1696 = vsel %vm1390, %v1530, 0.0
    %1697 = vadd.xlane.f32.xlu0 %v1696
    %v1698 = vpop.xlane.xlu0 %1697
    %v1699 = vsel %vm1390, %v1531, 0.0
    %1700 = vadd.xlane.f32.xlu0 %v1699
    %v1701 = vpop.xlane.xlu0 %1700
    %v1702 = vsel %vm1390, %v1532, 0.0
    %1703 = vadd.xlane.f32.xlu0 %v1702
    %v1704 = vpop.xlane.xlu0 %1703
    %v1705 = vsel %vm1390, %v1533, 0.0
    %1706 = vadd.xlane.f32.xlu0 %v1705
    %v1707 = vpop.xlane.xlu0 %1706
    %v1708 = vsel %vm1390, %v1534, 0.0
    %1709 = vadd.xlane.f32.xlu0 %v1708
    %v1710 = vpop.xlane.xlu0 %1709
    %v1711 = vsel %vm1390, %v1535, 0.0
    %1712 = vadd.xlane.f32.xlu0 %v1711
    %v1713 = vpop.xlane.xlu0 %1712
    %v1714 = vsel %vm1390, %v1536, 0.0
    %1715 = vadd.xlane.f32.xlu0 %v1714
    %v1716 = vpop.xlane.xlu0 %1715
    %v1717 = vsel %vm1390, %v1537, 0.0
    %1718 = vadd.xlane.f32.xlu0 %v1717
    %v1719 = vpop.xlane.xlu0 %1718
    %v1720 = vsel %vm1390, %v1538, 0.0
    %1721 = vadd.xlane.f32.xlu0 %v1720
    %v1722 = vpop.xlane.xlu0 %1721
    %v1723 = vsel %vm1390, %v1539, 0.0
    %1724 = vadd.xlane.f32.xlu0 %v1723
    %v1725 = vpop.xlane.xlu0 %1724
    %v1726 = vsel %vm1390, %v1540, 0.0
    %1727 = vadd.xlane.f32.xlu0 %v1726
    %v1728 = vpop.xlane.xlu0 %1727
    %v1729 = vsel %vm1390, %v1541, 0.0
    %1730 = vadd.xlane.f32.xlu0 %v1729
    %v1731 = vpop.xlane.xlu0 %1730
    %v1732 = vsel %vm1390, %v1542, 0.0
    %1733 = vadd.xlane.f32.xlu0 %v1732
    %v1734 = vpop.xlane.xlu0 %1733
    %v1735 = vrcp.pop %v1399
    %v1736 = vrcp.pop %v1400
    %v1739 = vperm.slane %v1735, 0
    %v1740 = vperm.slane %v1735, 1
    %v1741 = vperm.slane %v1735, 2
    %v1742 = vperm.slane %v1735, 3
    %v1743 = vperm.slane %v1735, 4
    %v1744 = vperm.slane %v1735, 5
    %v1745 = vperm.slane %v1735, 6
    %v1746 = vperm.slane %v1735, 7
    %v1747 = vperm.slane %v1736, 0
    %v1748 = vperm.slane %v1736, 1
    %v1749 = vperm.slane %v1736, 2
    %v1750 = vperm.slane %v1736, 3
    %v1751 = vperm.slane %v1736, 4
    %v1752 = vperm.slane %v1736, 5
    %v1753 = vperm.slane %v1736, 6
    %v1754 = vperm.slane %v1736, 7
    %v1771 = vmul.f32 %v1545, %v1739
    %v1772 = vmul.f32 %v1548, %v1739
    %v1773 = vmul.f32 %v1551, %v1739
    %v1774 = vmul.f32 %v1554, %v1739
    %v1775 = vmul.f32 %v1557, %v1740
    %v1776 = vmul.f32 %v1560, %v1740
    %v1777 = vmul.f32 %v1563, %v1740
    %v1778 = vmul.f32 %v1566, %v1740
    %v1779 = vmul.f32 %v1569, %v1741
    %v1780 = vmul.f32 %v1572, %v1741
    %v1781 = vmul.f32 %v1575, %v1741
    %v1782 = vmul.f32 %v1578, %v1741
    %v1783 = vmul.f32 %v1581, %v1742
    %v1784 = vmul.f32 %v1584, %v1742
    %v1785 = vmul.f32 %v1587, %v1742
    %v1786 = vmul.f32 %v1590, %v1742
    %v1787 = vmul.f32 %v1593, %v1743
    %v1788 = vmul.f32 %v1596, %v1743
    %v1789 = vmul.f32 %v1599, %v1743
    %v1790 = vmul.f32 %v1602, %v1743
    %v1791 = vmul.f32 %v1605, %v1744
    %v1792 = vmul.f32 %v1608, %v1744
    %v1793 = vmul.f32 %v1611, %v1744
    %v1794 = vmul.f32 %v1614, %v1744
    %v1795 = vmul.f32 %v1617, %v1745
    %v1796 = vmul.f32 %v1620, %v1745
    %v1797 = vmul.f32 %v1623, %v1745
    %v1798 = vmul.f32 %v1626, %v1745
    %v1799 = vmul.f32 %v1629, %v1746
    %v1800 = vmul.f32 %v1632, %v1746
    %v1801 = vmul.f32 %v1635, %v1746
    %v1802 = vmul.f32 %v1638, %v1746
    %v1803 = vmul.f32 %v1641, %v1747
    %v1804 = vmul.f32 %v1644, %v1747
    %v1805 = vmul.f32 %v1647, %v1747
    %v1806 = vmul.f32 %v1650, %v1747
    %v1807 = vmul.f32 %v1653, %v1748
    %v1808 = vmul.f32 %v1656, %v1748
    %v1809 = vmul.f32 %v1659, %v1748
    %v1810 = vmul.f32 %v1662, %v1748
    %v1811 = vmul.f32 %v1665, %v1749
    %v1812 = vmul.f32 %v1668, %v1749
    %v1813 = vmul.f32 %v1671, %v1749
    %v1814 = vmul.f32 %v1674, %v1749
    %v1815 = vmul.f32 %v1677, %v1750
    %v1816 = vmul.f32 %v1680, %v1750
    %v1817 = vmul.f32 %v1683, %v1750
    %v1818 = vmul.f32 %v1686, %v1750
    %v1819 = vmul.f32 %v1689, %v1751
    %v1820 = vmul.f32 %v1692, %v1751
    %v1821 = vmul.f32 %v1695, %v1751
    %v1822 = vmul.f32 %v1698, %v1751
    %v1823 = vmul.f32 %v1701, %v1752
    %v1824 = vmul.f32 %v1704, %v1752
    %v1825 = vmul.f32 %v1707, %v1752
    %v1826 = vmul.f32 %v1710, %v1752
    %v1827 = vmul.f32 %v1713, %v1753
    %v1828 = vmul.f32 %v1716, %v1753
    %v1829 = vmul.f32 %v1719, %v1753
    %v1830 = vmul.f32 %v1722, %v1753
    %v1831 = vmul.f32 %v1725, %v1754
    %v1832 = vmul.f32 %v1728, %v1754
    %v1833 = vmul.f32 %v1731, %v1754
    %v1834 = vmul.f32 %v1734, %v1754
    %1899 = vset.pattern.permute.xlu0 0
    %1900 = vperm.xlu0 %1899, %v1771
    %v1901 = vpop.permute.xlu0 %1900
    %1902 = vset.pattern.permute.xlu0 0
    %1903 = vperm.xlu0 %1902, %v1772
    %v1904 = vpop.permute.xlu0 %1903
    %1905 = vset.pattern.permute.xlu0 0
    %1906 = vperm.xlu0 %1905, %v1773
    %v1907 = vpop.permute.xlu0 %1906
    %1908 = vset.pattern.permute.xlu0 0
    %1909 = vperm.xlu0 %1908, %v1774
    %v1910 = vpop.permute.xlu0 %1909
    %1911 = vset.pattern.permute.xlu0 0
    %1912 = vperm.xlu0 %1911, %v1775
    %v1913 = vpop.permute.xlu0 %1912
    %1914 = vset.pattern.permute.xlu0 0
    %1915 = vperm.xlu0 %1914, %v1776
    %v1916 = vpop.permute.xlu0 %1915
    %1917 = vset.pattern.permute.xlu0 0
    %1918 = vperm.xlu0 %1917, %v1777
    %v1919 = vpop.permute.xlu0 %1918
    %1920 = vset.pattern.permute.xlu0 0
    %1921 = vperm.xlu0 %1920, %v1778
    %v1922 = vpop.permute.xlu0 %1921
    %1923 = vset.pattern.permute.xlu0 0
    %1924 = vperm.xlu0 %1923, %v1779
    %v1925 = vpop.permute.xlu0 %1924
    %1926 = vset.pattern.permute.xlu0 0
    %1927 = vperm.xlu0 %1926, %v1780
    %v1928 = vpop.permute.xlu0 %1927
    %1929 = vset.pattern.permute.xlu0 0
    %1930 = vperm.xlu0 %1929, %v1781
    %v1931 = vpop.permute.xlu0 %1930
    %1932 = vset.pattern.permute.xlu0 0
    %1933 = vperm.xlu0 %1932, %v1782
    %v1934 = vpop.permute.xlu0 %1933
    %1935 = vset.pattern.permute.xlu0 0
    %1936 = vperm.xlu0 %1935, %v1783
    %v1937 = vpop.permute.xlu0 %1936
    %1938 = vset.pattern.permute.xlu0 0
    %1939 = vperm.xlu0 %1938, %v1784
    %v1940 = vpop.permute.xlu0 %1939
    %1941 = vset.pattern.permute.xlu0 0
    %1942 = vperm.xlu0 %1941, %v1785
    %v1943 = vpop.permute.xlu0 %1942
    %1944 = vset.pattern.permute.xlu0 0
    %1945 = vperm.xlu0 %1944, %v1786
    %v1946 = vpop.permute.xlu0 %1945
    %1947 = vset.pattern.permute.xlu0 0
    %1948 = vperm.xlu0 %1947, %v1787
    %v1949 = vpop.permute.xlu0 %1948
    %1950 = vset.pattern.permute.xlu0 0
    %1951 = vperm.xlu0 %1950, %v1788
    %v1952 = vpop.permute.xlu0 %1951
    %1953 = vset.pattern.permute.xlu0 0
    %1954 = vperm.xlu0 %1953, %v1789
    %v1955 = vpop.permute.xlu0 %1954
    %1956 = vset.pattern.permute.xlu0 0
    %1957 = vperm.xlu0 %1956, %v1790
    %v1958 = vpop.permute.xlu0 %1957
    %1959 = vset.pattern.permute.xlu0 0
    %1960 = vperm.xlu0 %1959, %v1791
    %v1961 = vpop.permute.xlu0 %1960
    %1962 = vset.pattern.permute.xlu0 0
    %1963 = vperm.xlu0 %1962, %v1792
    %v1964 = vpop.permute.xlu0 %1963
    %1965 = vset.pattern.permute.xlu0 0
    %1966 = vperm.xlu0 %1965, %v1793
    %v1967 = vpop.permute.xlu0 %1966
    %1968 = vset.pattern.permute.xlu0 0
    %1969 = vperm.xlu0 %1968, %v1794
    %v1970 = vpop.permute.xlu0 %1969
    %1971 = vset.pattern.permute.xlu0 0
    %1972 = vperm.xlu0 %1971, %v1795
    %v1973 = vpop.permute.xlu0 %1972
    %1974 = vset.pattern.permute.xlu0 0
    %1975 = vperm.xlu0 %1974, %v1796
    %v1976 = vpop.permute.xlu0 %1975
    %1977 = vset.pattern.permute.xlu0 0
    %1978 = vperm.xlu0 %1977, %v1797
    %v1979 = vpop.permute.xlu0 %1978
    %1980 = vset.pattern.permute.xlu0 0
    %1981 = vperm.xlu0 %1980, %v1798
    %v1982 = vpop.permute.xlu0 %1981
    %1983 = vset.pattern.permute.xlu0 0
    %1984 = vperm.xlu0 %1983, %v1799
    %v1985 = vpop.permute.xlu0 %1984
    %1986 = vset.pattern.permute.xlu0 0
    %1987 = vperm.xlu0 %1986, %v1800
    %v1988 = vpop.permute.xlu0 %1987
    %1989 = vset.pattern.permute.xlu0 0
    %1990 = vperm.xlu0 %1989, %v1801
    %v1991 = vpop.permute.xlu0 %1990
    %1992 = vset.pattern.permute.xlu0 0
    %1993 = vperm.xlu0 %1992, %v1802
    %v1994 = vpop.permute.xlu0 %1993
    %1995 = vset.pattern.permute.xlu0 0
    %1996 = vperm.xlu0 %1995, %v1803
    %v1997 = vpop.permute.xlu0 %1996
    %1998 = vset.pattern.permute.xlu0 0
    %1999 = vperm.xlu0 %1998, %v1804
    %v2000 = vpop.permute.xlu0 %1999
    %2001 = vset.pattern.permute.xlu0 0
    %2002 = vperm.xlu0 %2001, %v1805
    %v2003 = vpop.permute.xlu0 %2002
    %2004 = vset.pattern.permute.xlu0 0
    %2005 = vperm.xlu0 %2004, %v1806
    %v2006 = vpop.permute.xlu0 %2005
    %2007 = vset.pattern.permute.xlu0 0
    %2008 = vperm.xlu0 %2007, %v1807
    %v2009 = vpop.permute.xlu0 %2008
    %2010 = vset.pattern.permute.xlu0 0
    %2011 = vperm.xlu0 %2010, %v1808
    %v2012 = vpop.permute.xlu0 %2011
    %2013 = vset.pattern.permute.xlu0 0
    %2014 = vperm.xlu0 %2013, %v1809
    %v2015 = vpop.permute.xlu0 %2014
    %2016 = vset.pattern.permute.xlu0 0
    %2017 = vperm.xlu0 %2016, %v1810
    %v2018 = vpop.permute.xlu0 %2017
    %2019 = vset.pattern.permute.xlu0 0
    %2020 = vperm.xlu0 %2019, %v1811
    %v2021 = vpop.permute.xlu0 %2020
    %2022 = vset.pattern.permute.xlu0 0
    %2023 = vperm.xlu0 %2022, %v1812
    %v2024 = vpop.permute.xlu0 %2023
    %2025 = vset.pattern.permute.xlu0 0
    %2026 = vperm.xlu0 %2025, %v1813
    %v2027 = vpop.permute.xlu0 %2026
    %2028 = vset.pattern.permute.xlu0 0
    %2029 = vperm.xlu0 %2028, %v1814
    %v2030 = vpop.permute.xlu0 %2029
    %2031 = vset.pattern.permute.xlu0 0
    %2032 = vperm.xlu0 %2031, %v1815
    %v2033 = vpop.permute.xlu0 %2032
    %2034 = vset.pattern.permute.xlu0 0
    %2035 = vperm.xlu0 %2034, %v1816
    %v2036 = vpop.permute.xlu0 %2035
    %2037 = vset.pattern.permute.xlu0 0
    %2038 = vperm.xlu0 %2037, %v1817
    %v2039 = vpop.permute.xlu0 %2038
    %2040 = vset.pattern.permute.xlu0 0
    %2041 = vperm.xlu0 %2040, %v1818
    %v2042 = vpop.permute.xlu0 %2041
    %2043 = vset.pattern.permute.xlu0 0
    %2044 = vperm.xlu0 %2043, %v1819
    %v2045 = vpop.permute.xlu0 %2044
    %2046 = vset.pattern.permute.xlu0 0
    %2047 = vperm.xlu0 %2046, %v1820
    %v2048 = vpop.permute.xlu0 %2047
    %2049 = vset.pattern.permute.xlu0 0
    %2050 = vperm.xlu0 %2049, %v1821
    %v2051 = vpop.permute.xlu0 %2050
    %2052 = vset.pattern.permute.xlu0 0
    %2053 = vperm.xlu0 %2052, %v1822
    %v2054 = vpop.permute.xlu0 %2053
    %2055 = vset.pattern.permute.xlu0 0
    %2056 = vperm.xlu0 %2055, %v1823
    %v2057 = vpop.permute.xlu0 %2056
    %2058 = vset.pattern.permute.xlu0 0
    %2059 = vperm.xlu0 %2058, %v1824
    %v2060 = vpop.permute.xlu0 %2059
    %2061 = vset.pattern.permute.xlu0 0
    %2062 = vperm.xlu0 %2061, %v1825
    %v2063 = vpop.permute.xlu0 %2062
    %2064 = vset.pattern.permute.xlu0 0
    %2065 = vperm.xlu0 %2064, %v1826
    %v2066 = vpop.permute.xlu0 %2065
    %2067 = vset.pattern.permute.xlu0 0
    %2068 = vperm.xlu0 %2067, %v1827
    %v2069 = vpop.permute.xlu0 %2068
    %2070 = vset.pattern.permute.xlu0 0
    %2071 = vperm.xlu0 %2070, %v1828
    %v2072 = vpop.permute.xlu0 %2071
    %2073 = vset.pattern.permute.xlu0 0
    %2074 = vperm.xlu0 %2073, %v1829
    %v2075 = vpop.permute.xlu0 %2074
    %2076 = vset.pattern.permute.xlu0 0
    %2077 = vperm.xlu0 %2076, %v1830
    %v2078 = vpop.permute.xlu0 %2077
    %2079 = vset.pattern.permute.xlu0 0
    %2080 = vperm.xlu0 %2079, %v1831
    %v2081 = vpop.permute.xlu0 %2080
    %2082 = vset.pattern.permute.xlu0 0
    %2083 = vperm.xlu0 %2082, %v1832
    %v2084 = vpop.permute.xlu0 %2083
    %2085 = vset.pattern.permute.xlu0 0
    %2086 = vperm.xlu0 %2085, %v1833
    %v2087 = vpop.permute.xlu0 %2086
    %2088 = vset.pattern.permute.xlu0 0
    %2089 = vperm.xlu0 %2088, %v1834
    %v2090 = vpop.permute.xlu0 %2089
    %v2091 = vlaneseq
    %v2092 = vand.u32 %v2091, 127
    %v2093 = vadd.s32 %v2092, 4294967232
    %v2094 = vperm.slane %v1901, %v2093
    %v2095 = vadd.s32 %v2092, 4294967224
    %v2096 = vperm.slane %v1904, %v2095
    %vm2097 = vcmask 654912
    %v2098 = vsel %vm2097, %v2096, %v2094
    %v2099 = vadd.s32 %v2092, 4294967216
    %v2100 = vperm.slane %v1907, %v2099
    %vm2101 = vcmask 720512
    %v2102 = vsel %vm2101, %v2100, %v2098
    %v2103 = vadd.s32 %v2092, 4294967208
    %v2104 = vperm.slane %v1910, %v2103
    %vm2105 = vcmask 786112
    %v2106 = vsel %vm2105, %v2104, %v2102
    %v2107 = vperm.slane %v1913, %v2093
    %v2108 = vperm.slane %v1916, %v2095
    %v2109 = vsel %vm2097, %v2108, %v2107
    %v2110 = vperm.slane %v1919, %v2099
    %v2111 = vsel %vm2101, %v2110, %v2109
    %v2112 = vperm.slane %v1922, %v2103
    %v2113 = vsel %vm2105, %v2112, %v2111
    %v2114 = vperm.slane %v1925, %v2093
    %v2115 = vperm.slane %v1928, %v2095
    %v2116 = vsel %vm2097, %v2115, %v2114
    %v2117 = vperm.slane %v1931, %v2099
    %v2118 = vsel %vm2101, %v2117, %v2116
    %v2119 = vperm.slane %v1934, %v2103
    %v2120 = vsel %vm2105, %v2119, %v2118
    %v2121 = vperm.slane %v1937, %v2093
    %v2122 = vperm.slane %v1940, %v2095
    %v2123 = vsel %vm2097, %v2122, %v2121
    %v2124 = vperm.slane %v1943, %v2099
    %v2125 = vsel %vm2101, %v2124, %v2123
    %v2126 = vperm.slane %v1946, %v2103
    %v2127 = vsel %vm2105, %v2126, %v2125
    %v2128 = vperm.slane %v1949, %v2093
    %v2129 = vperm.slane %v1952, %v2095
    %v2130 = vsel %vm2097, %v2129, %v2128
    %v2131 = vperm.slane %v1955, %v2099
    %v2132 = vsel %vm2101, %v2131, %v2130
    %v2133 = vperm.slane %v1958, %v2103
    %v2134 = vsel %vm2105, %v2133, %v2132
    %v2135 = vperm.slane %v1961, %v2093
    %v2136 = vperm.slane %v1964, %v2095
    %v2137 = vsel %vm2097, %v2136, %v2135
    %v2138 = vperm.slane %v1967, %v2099
    %v2139 = vsel %vm2101, %v2138, %v2137
    %v2140 = vperm.slane %v1970, %v2103
    %v2141 = vsel %vm2105, %v2140, %v2139
    %v2142 = vperm.slane %v1973, %v2093
    %v2143 = vperm.slane %v1976, %v2095
    %v2144 = vsel %vm2097, %v2143, %v2142
    %v2145 = vperm.slane %v1979, %v2099
    %v2146 = vsel %vm2101, %v2145, %v2144
    %v2147 = vperm.slane %v1982, %v2103
    %v2148 = vsel %vm2105, %v2147, %v2146
    %v2149 = vperm.slane %v1985, %v2093
    %v2150 = vperm.slane %v1988, %v2095
    %v2151 = vsel %vm2097, %v2150, %v2149
    %v2152 = vperm.slane %v1991, %v2099
    %v2153 = vsel %vm2101, %v2152, %v2151
    %v2154 = vperm.slane %v1994, %v2103
    %v2155 = vsel %vm2105, %v2154, %v2153
    %v2156 = vperm.slane %v1997, %v2093
    %v2157 = vperm.slane %v2000, %v2095
    %v2158 = vsel %vm2097, %v2157, %v2156
    %v2159 = vperm.slane %v2003, %v2099
    %v2160 = vsel %vm2101, %v2159, %v2158
    %v2161 = vperm.slane %v2006, %v2103
    %v2162 = vsel %vm2105, %v2161, %v2160
    %v2163 = vperm.slane %v2009, %v2093
    %v2164 = vperm.slane %v2012, %v2095
    %v2165 = vsel %vm2097, %v2164, %v2163
    %v2166 = vperm.slane %v2015, %v2099
    %v2167 = vsel %vm2101, %v2166, %v2165
    %v2168 = vperm.slane %v2018, %v2103
    %v2169 = vsel %vm2105, %v2168, %v2167
    %v2170 = vperm.slane %v2021, %v2093
    %v2171 = vperm.slane %v2024, %v2095
    %v2172 = vsel %vm2097, %v2171, %v2170
    %v2173 = vperm.slane %v2027, %v2099
    %v2174 = vsel %vm2101, %v2173, %v2172
    %v2175 = vperm.slane %v2030, %v2103
    %v2176 = vsel %vm2105, %v2175, %v2174
    %v2177 = vperm.slane %v2033, %v2093
    %v2178 = vperm.slane %v2036, %v2095
    %v2179 = vsel %vm2097, %v2178, %v2177
    %v2180 = vperm.slane %v2039, %v2099
    %v2181 = vsel %vm2101, %v2180, %v2179
    %v2182 = vperm.slane %v2042, %v2103
    %v2183 = vsel %vm2105, %v2182, %v2181
    %v2184 = vperm.slane %v2045, %v2093
    %v2185 = vperm.slane %v2048, %v2095
    %v2186 = vsel %vm2097, %v2185, %v2184
    %v2187 = vperm.slane %v2051, %v2099
    %v2188 = vsel %vm2101, %v2187, %v2186
    %v2189 = vperm.slane %v2054, %v2103
    %v2190 = vsel %vm2105, %v2189, %v2188
    %v2191 = vperm.slane %v2057, %v2093
    %v2192 = vperm.slane %v2060, %v2095
    %v2193 = vsel %vm2097, %v2192, %v2191
    %v2194 = vperm.slane %v2063, %v2099
    %v2195 = vsel %vm2101, %v2194, %v2193
    %v2196 = vperm.slane %v2066, %v2103
    %v2197 = vsel %vm2105, %v2196, %v2195
    %v2198 = vperm.slane %v2069, %v2093
    %v2199 = vperm.slane %v2072, %v2095
    %v2200 = vsel %vm2097, %v2199, %v2198
    %v2201 = vperm.slane %v2075, %v2099
    %v2202 = vsel %vm2101, %v2201, %v2200
    %v2203 = vperm.slane %v2078, %v2103
    %v2204 = vsel %vm2105, %v2203, %v2202
    %v2205 = vperm.slane %v2081, %v2093
    %v2206 = vperm.slane %v2084, %v2095
    %v2207 = vsel %vm2097, %v2206, %v2205
    %v2208 = vperm.slane %v2087, %v2099
    %v2209 = vsel %vm2101, %v2208, %v2207
    %v2210 = vperm.slane %v2090, %v2103
    %v2211 = vsel %vm2105, %v2210, %v2209
    %vm2212 = vcmask 1041409
    %v2213 = vsel %vm2212, %v2113, %v2106
    %vm2214 = vcmask 1042434
    %v2215 = vsel %vm2214, %v2120, %v2213
    %vm2216 = vcmask 1043459
    %v2217 = vsel %vm2216, %v2127, %v2215
    %vm2218 = vcmask 1044484
    %v2219 = vsel %vm2218, %v2134, %v2217
    %vm2220 = vcmask 1045509
    %v2221 = vsel %vm2220, %v2141, %v2219
    %vm2222 = vcmask 1046534
    %v2223 = vsel %vm2222, %v2148, %v2221
    %vm2224 = vcmask 1047559
    %v2225 = vsel %vm2224, %v2155, %v2223
    %v2226 = vsel %vm2212, %v2169, %v2162
    %v2227 = vsel %vm2214, %v2176, %v2226
    %v2228 = vsel %vm2216, %v2183, %v2227
    %v2229 = vsel %vm2218, %v2190, %v2228
    %v2230 = vsel %vm2220, %v2197, %v2229
    %v2231 = vsel %vm2222, %v2204, %v2230
    %v2232 = vsel %vm2224, %v2211, %v2231
    %v2235 = vmul.f32 %v254, %v2225
    %v2236 = vmul.f32 %v269, %v2232
    %2239 = vrot.lane.b32.xlu0 %v2235, 64
    %v2240 = vpop.permute.xlu0 %2239
    %2241 = vrot.lane.b32.xlu0 %v2236, 64
    %v2242 = vpop.permute.xlu0 %2241
    %2245 = vst.msk [vmem:[#allocation8] sm:$0xff] %vm1390, %v2240
    %2246 = vst.msk [vmem:[#allocation8 + $0x8] sm:$0xff] %vm1390, %v2242
    %2247 = vst.msk [vmem:[#allocation9] sm:$0xff] %vm1390, %v1288
    %2248 = vst.msk [vmem:[#allocation9 + $0x8] sm:$0xff] %vm1390, %v1289
    %2249 = vst.msk [vmem:[#allocation9 + $0x10] sm:$0xff] %vm1390, %v1290
    %2250 = vst.msk [vmem:[#allocation9 + $0x18] sm:$0xff] %vm1390, %v1291
    %2251 = vst.msk [vmem:[#allocation9 + $0x20] sm:$0xff] %vm1390, %v1292
    %2252 = vst.msk [vmem:[#allocation9 + $0x28] sm:$0xff] %vm1390, %v1293
    %2253 = vst.msk [vmem:[#allocation9 + $0x30] sm:$0xff] %vm1390, %v1294
    %2254 = vst.msk [vmem:[#allocation9 + $0x38] sm:$0xff] %vm1390, %v1295
    %2255 = vst.msk [vmem:[#allocation9 + $0x40] sm:$0xff] %vm1390, %v1296
    %2256 = vst.msk [vmem:[#allocation9 + $0x48] sm:$0xff] %vm1390, %v1297
    %2257 = vst.msk [vmem:[#allocation9 + $0x50] sm:$0xff] %vm1390, %v1298
    %2258 = vst.msk [vmem:[#allocation9 + $0x58] sm:$0xff] %vm1390, %v1299
    %2259 = vst.msk [vmem:[#allocation9 + $0x60] sm:$0xff] %vm1390, %v1300
    %2260 = vst.msk [vmem:[#allocation9 + $0x68] sm:$0xff] %vm1390, %v1301
    %2261 = vst.msk [vmem:[#allocation9 + $0x70] sm:$0xff] %vm1390, %v1302
    %2262 = vst.msk [vmem:[#allocation9 + $0x78] sm:$0xff] %vm1390, %v1303
    %2263 = vst.msk [vmem:[#allocation9 + $0x80] sm:$0xff] %vm1390, %v1304
    %2264 = vst.msk [vmem:[#allocation9 + $0x88] sm:$0xff] %vm1390, %v1305
    %2265 = vst.msk [vmem:[#allocation9 + $0x90] sm:$0xff] %vm1390, %v1306
    %2266 = vst.msk [vmem:[#allocation9 + $0x98] sm:$0xff] %vm1390, %v1307
    %2267 = vst.msk [vmem:[#allocation9 + $0xa0] sm:$0xff] %vm1390, %v1308
    %2268 = vst.msk [vmem:[#allocation9 + $0xa8] sm:$0xff] %vm1390, %v1309
    %2269 = vst.msk [vmem:[#allocation9 + $0xb0] sm:$0xff] %vm1390, %v1310
    %2270 = vst.msk [vmem:[#allocation9 + $0xb8] sm:$0xff] %vm1390, %v1311
    %2271 = vst.msk [vmem:[#allocation9 + $0xc0] sm:$0xff] %vm1390, %v1312
    %2272 = vst.msk [vmem:[#allocation9 + $0xc8] sm:$0xff] %vm1390, %v1313
    %2273 = vst.msk [vmem:[#allocation9 + $0xd0] sm:$0xff] %vm1390, %v1314
    %2274 = vst.msk [vmem:[#allocation9 + $0xd8] sm:$0xff] %vm1390, %v1315
    %2275 = vst.msk [vmem:[#allocation9 + $0xe0] sm:$0xff] %vm1390, %v1316
    %2276 = vst.msk [vmem:[#allocation9 + $0xe8] sm:$0xff] %vm1390, %v1317
    %2277 = vst.msk [vmem:[#allocation9 + $0xf0] sm:$0xff] %vm1390, %v1318
    %2278 = vst.msk [vmem:[#allocation9 + $0xf8] sm:$0xff] %vm1390, %v1319
    %2279 = vst.msk [vmem:[#allocation9 + $0x100] sm:$0xff] %vm1390, %v1320
    %2280 = vst.msk [vmem:[#allocation9 + $0x108] sm:$0xff] %vm1390, %v1321
    %2281 = vst.msk [vmem:[#allocation9 + $0x110] sm:$0xff] %vm1390, %v1322
    %2282 = vst.msk [vmem:[#allocation9 + $0x118] sm:$0xff] %vm1390, %v1323
    %2283 = vst.msk [vmem:[#allocation9 + $0x120] sm:$0xff] %vm1390, %v1324
    %2284 = vst.msk [vmem:[#allocation9 + $0x128] sm:$0xff] %vm1390, %v1325
    %2285 = vst.msk [vmem:[#allocation9 + $0x130] sm:$0xff] %vm1390, %v1326
    %2286 = vst.msk [vmem:[#allocation9 + $0x138] sm:$0xff] %vm1390, %v1327
    %2287 = vst.msk [vmem:[#allocation9 + $0x140] sm:$0xff] %vm1390, %v1328
    %2288 = vst.msk [vmem:[#allocation9 + $0x148] sm:$0xff] %vm1390, %v1329
    %2289 = vst.msk [vmem:[#allocation9 + $0x150] sm:$0xff] %vm1390, %v1330
    %2290 = vst.msk [vmem:[#allocation9 + $0x158] sm:$0xff] %vm1390, %v1331
    %2291 = vst.msk [vmem:[#allocation9 + $0x160] sm:$0xff] %vm1390, %v1332
    %2292 = vst.msk [vmem:[#allocation9 + $0x168] sm:$0xff] %vm1390, %v1333
    %2293 = vst.msk [vmem:[#allocation9 + $0x170] sm:$0xff] %vm1390, %v1334
    %2294 = vst.msk [vmem:[#allocation9 + $0x178] sm:$0xff] %vm1390, %v1335
    %2295 = vst.msk [vmem:[#allocation9 + $0x180] sm:$0xff] %vm1390, %v1336
    %2296 = vst.msk [vmem:[#allocation9 + $0x188] sm:$0xff] %vm1390, %v1337
    %2297 = vst.msk [vmem:[#allocation9 + $0x190] sm:$0xff] %vm1390, %v1338
    %2298 = vst.msk [vmem:[#allocation9 + $0x198] sm:$0xff] %vm1390, %v1339
    %2299 = vst.msk [vmem:[#allocation9 + $0x1a0] sm:$0xff] %vm1390, %v1340
    %2300 = vst.msk [vmem:[#allocation9 + $0x1a8] sm:$0xff] %vm1390, %v1341
    %2301 = vst.msk [vmem:[#allocation9 + $0x1b0] sm:$0xff] %vm1390, %v1342
    %2302 = vst.msk [vmem:[#allocation9 + $0x1b8] sm:$0xff] %vm1390, %v1343
    %2303 = vst.msk [vmem:[#allocation9 + $0x1c0] sm:$0xff] %vm1390, %v1344
    %2304 = vst.msk [vmem:[#allocation9 + $0x1c8] sm:$0xff] %vm1390, %v1345
    %2305 = vst.msk [vmem:[#allocation9 + $0x1d0] sm:$0xff] %vm1390, %v1346
    %2306 = vst.msk [vmem:[#allocation9 + $0x1d8] sm:$0xff] %vm1390, %v1347
    %2307 = vst.msk [vmem:[#allocation9 + $0x1e0] sm:$0xff] %vm1390, %v1348
    %2308 = vst.msk [vmem:[#allocation9 + $0x1e8] sm:$0xff] %vm1390, %v1349
    %2309 = vst.msk [vmem:[#allocation9 + $0x1f0] sm:$0xff] %vm1390, %v1350
    %2310 = vst.msk [vmem:[#allocation9 + $0x1f8] sm:$0xff] %vm1390, %v1351
    %2313 = vrot.lane.b32.xlu0 %v1372, 96
    %v2314 = vpop.permute.xlu0 %2313
    %2315 = vrot.lane.b32.xlu0 %v1373, 96
    %v2316 = vpop.permute.xlu0 %2315
    %2319 = vst.msk [vmem:[#allocation11] sm:$0xff] %vm1390, %v2314
    %2320 = vst.msk [vmem:[#allocation11 + $0x8] sm:$0xff] %vm1390, %v2316
    %2321 = vst.msk [vmem:[#allocation12] sm:$0xff] %vm1390, %v293
    %2322 = vst.msk [vmem:[#allocation12 + $0x8] sm:$0xff] %vm1390, %v295
    // Predicated region
    $region38: #{mlstm_cell_forward.1} parent=1 // pred_check
      _
    $region39: #{mlstm_cell_forward.1} parent=1 // pred_check_branch
      %2324 = sbr.rel (0) target = $region41
    $region40: #{mlstm_cell_forward.1} parent=1 // pred_region
      %2326 = vsyncadd [#allocation4], 0
      %s2327 = sshll.u32 [#allocation8], 4
      %s2328 = int_to_ptr.vmem [resolvable:$true] %s2327
      %s2329 = sshll.u32 %s6, 4
      %s2330 = int_to_ptr.hbm [resolvable:$true] %s2329
      %2335 = dma.vmem_to_hbm [thread:$0]  %s2328, 256, %s2330, [#allocation4], 128, 128, 8
    $region41: #{mlstm_cell_forward.1} parent=1 // pred_fallthru
      _
    // Predicated region
    $region42: #{mlstm_cell_forward.1} parent=1 // pred_check
      _
    $region43: #{mlstm_cell_forward.1} parent=1 // pred_check_branch
      %2337 = sbr.rel (0) target = $region45
    $region44: #{mlstm_cell_forward.1} parent=1 // pred_region
      %2339 = vsyncadd [#allocation10], 0
      %s2340 = sshll.u32 [#allocation9], 4
      %s2341 = int_to_ptr.vmem [resolvable:$true] %s2340
      %s2342 = sshll.u32 %s7, 4
      %s2343 = int_to_ptr.hbm [resolvable:$true] %s2342
      %2348 = dma.vmem_to_hbm [thread:$0]  %s2341, 8192, %s2343, [#allocation10], 128, 128, 8
    $region45: #{mlstm_cell_forward.1} parent=1 // pred_fallthru
      _
    // Predicated region
    $region46: #{mlstm_cell_forward.1} parent=1 // pred_check
      _
    $region47: #{mlstm_cell_forward.1} parent=1 // pred_check_branch
      %2350 = sbr.rel (0) target = $region49
    $region48: #{mlstm_cell_forward.1} parent=1 // pred_region
      %2352 = vsyncadd [#allocation10], 0
      %s2353 = sshll.u32 [#allocation11], 4
      %s2354 = int_to_ptr.vmem [resolvable:$true] %s2353
      %s2355 = sshll.u32 %s8, 4
      %s2356 = int_to_ptr.hbm [resolvable:$true] %s2355
      %2361 = dma.vmem_to_hbm [thread:$0]  %s2354, 256, %s2356, [#allocation10], 128, 128, 8
    $region49: #{mlstm_cell_forward.1} parent=1 // pred_fallthru
      _
    // Predicated region
    $region50: #{mlstm_cell_forward.1} parent=1 // pred_check
      _
    $region51: #{mlstm_cell_forward.1} parent=1 // pred_check_branch
      %2363 = sbr.rel (0) target = $region53
    $region52: #{mlstm_cell_forward.1} parent=1 // pred_region
      %2365 = vsyncadd [#allocation13], 0
      %s2366 = sshll.u32 [#allocation12], 4
      %s2367 = int_to_ptr.vmem [resolvable:$true] %s2366
      %s2368 = sshll.u32 %s9, 4
      %s2369 = int_to_ptr.hbm [resolvable:$true] %s2368
      %2374 = dma.vmem_to_hbm [thread:$0]  %s2367, 256, %s2369, [#allocation13], 128, 128, 8
    $region53: #{mlstm_cell_forward.1} parent=1 // pred_fallthru
      _
    // Predicated region
    $region54: #{mlstm_cell_forward.1} parent=1 // pred_check
      _
    $region55: #{mlstm_cell_forward.1} parent=1 // pred_check_branch
      %2376 = sbr.rel (0) target = $region57
    $region56: #{mlstm_cell_forward.1} parent=1 // pred_region
      %2378 = dma.done [#allocation4], 256
    $region57: #{mlstm_cell_forward.1} parent=1 // pred_fallthru
      _
    // Predicated region
    $region58: #{mlstm_cell_forward.1} parent=1 // pred_check
      _
    $region59: #{mlstm_cell_forward.1} parent=1 // pred_check_branch
      %2380 = sbr.rel (0) target = $region61
    $region60: #{mlstm_cell_forward.1} parent=1 // pred_region
      %2382 = dma.done [#allocation10], 8192
    $region61: #{mlstm_cell_forward.1} parent=1 // pred_fallthru
      _
    // Predicated region
    $region62: #{mlstm_cell_forward.1} parent=1 // pred_check
      _
    $region63: #{mlstm_cell_forward.1} parent=1 // pred_check_branch
      %2384 = sbr.rel (0) target = $region65
    $region64: #{mlstm_cell_forward.1} parent=1 // pred_region
      %2386 = dma.done [#allocation10], 256
    $region65: #{mlstm_cell_forward.1} parent=1 // pred_fallthru
      _
    // Predicated region
    $region66: #{mlstm_cell_forward.1} parent=1 // pred_check
      _
    $region67: #{mlstm_cell_forward.1} parent=1 // pred_check_branch
      %2388 = sbr.rel (0) target = $region69
    $region68: #{mlstm_cell_forward.1} parent=1 // pred_region
      %2390 = dma.done [#allocation13], 256
    $region69: #{mlstm_cell_forward.1} parent=1 // pred_fallthru
      _
    %2391 = vsyncpa [#allocation3], 1
    %2392 = vsyncpa [#allocation6], 1
    %2393 = vsyncpa [#allocation4], 1
    %2394 = vsyncpa [#allocation10], 1
    %2395 = vsyncpa [#allocation13], 1

</llo_original>
